<compile_context>
chip_gen: v6e
topology: v6e:2x2x1
jax: 0.10.0
libtpu: 0.0.40
codegen_flags: <defaults>
</compile_context>

<pallas_src>
import functools

import jax
import jax.numpy as jnp
from jax import lax
from jax.experimental import pallas as pl
from jax.experimental.pallas import tpu as pltpu


def _round_up(x, m):
    return ((x + m - 1) // m) * m


def _vmem_capacity_bytes():
    """Physical per-core VMEM (generation aware); conservative fallback."""
    try:
        info = pltpu.get_tpu_info()
        cap = int(getattr(info, "vmem_capacity_bytes", 0))
        if cap > 0:
            return cap
    except Exception:
        pass
    return 64 << 20  # v7x-sized conservative default


def _pick_build_chunk(S_pad, requested=None):
    """Sublane slab height for the chunked mt build."""
    if requested is not None:
        requested = int(requested)
        assert requested % 8 == 0 and S_pad % requested == 0, (
            "build_chunk must be a multiple of 8 dividing S_pad")
        return requested
    for cand in (512, 256, 128):
        if S_pad % cand == 0:
            return cand
    return 128  # unreachable: S_pad is always a multiple of 128


def _bilinear_corners(px, py, H, W):
    """Corner flat indices + weights, CUDA bilinear_interpolate semantics.

    px, py: float32 arrays of identical shape.  Returns list of
    (flat_index int32, weight float32) pairs (4 per sample point).
    """
    valid = ((py >= -1.0) & (py <= float(H)) &
             (px >= -1.0) & (px <= float(W)))
    y = jnp.maximum(py, 0.0)
    x = jnp.maximum(px, 0.0)
    y_low = jnp.floor(y).astype(jnp.int32)
    x_low = jnp.floor(x).astype(jnp.int32)
    y_clip = y_low >= H - 1
    x_clip = x_low >= W - 1
    y_low = jnp.where(y_clip, H - 1, y_low)
    x_low = jnp.where(x_clip, W - 1, x_low)
    y_high = jnp.where(y_clip, H - 1, y_low + 1)
    x_high = jnp.where(x_clip, W - 1, x_low + 1)
    yc = jnp.where(y_clip, y_low.astype(jnp.float32), y)
    xc = jnp.where(x_clip, x_low.astype(jnp.float32), x)
    ly = yc - y_low.astype(jnp.float32)
    lx = xc - x_low.astype(jnp.float32)
    hy = 1.0 - ly
    hx = 1.0 - lx
    vm = valid.astype(jnp.float32)
    return [
        (y_low * W + x_low, hy * hx * vm),
        (y_low * W + x_high, hy * lx * vm),
        (y_high * W + x_low, ly * hx * vm),
        (y_high * W + x_high, ly * lx * vm),
    ]


def _sample_points(box, spatial_scale, points):
    """box: (5, T) -> lists of px, py each of shape (1, T)."""
    cx = box[0:1, :] * spatial_scale
    cy = box[1:2, :] * spatial_scale
    pxs, pys = [cx], [cy]
    if points == 5:
        w2 = box[2:3, :] * spatial_scale * 0.5
        h2 = box[3:4, :] * spatial_scale * 0.5
        ang = box[4:5, :]
        cosa = jnp.cos(ang)
        sina = jnp.sin(ang)
        wx = cosa * w2
        wy = sina * w2
        hx = -sina * h2
        hy = cosa * h2
        pxs += [cx + wx + hx, cx - wx + hx, cx - wx - hx, cx + wx - hx]
        pys += [cy + wy + hy, cy - wy + hy, cy - wy - hy, cy + wy - hy]
    return pxs, pys


def _fr_kernel(feat_ref, box_ref, out_ref, mt_ref, *,
               H, W, spatial_scale, points, tgt_tile, build_chunk,
               tgt_axis, gate_on_c, use_bf16):
    """One grid step.

    feat_ref: (1, c_tile, S_pad) f32   full source row for this channel tile
    box_ref:  (1, 5, tgt_tile)  f32    boxes for the current target tile
    out_ref:  (1, c_tile, tgt_tile) f32
    mt_ref:   (S_pad, tgt_tile) bf16/f32 scratch (interpolation matrix)
    """
    t_idx = pl.program_id(tgt_axis)
    S_pad = feat_ref.shape[2]
    n_chunks = S_pad // build_chunk
    mt_dtype = mt_ref.dtype

    def _build_interp_matrix():
        box = box_ref[0]                                   # (5, tgt_tile)
        pxs, pys = _sample_points(box, spatial_scale, points)
        corners = []
        for px, py in zip(pxs, pys):                       # static: 1 or 5 pts
            corners.extend(_bilinear_corners(px, py, H, W))

        def chunk_body(ci, carry):
            row0 = pl.multiple_of(ci * build_chunk, build_chunk)
            # Column iota (chunk, 1) broadcast against (1, T) corner indices:
            # avoids materializing a full (S_pad, T) int32 iota and keeps the
            # accumulation temporaries at slab size.
            src = (lax.broadcasted_iota(jnp.int32, (build_chunk, 1), 0)
                   + ci * build_chunk)
            acc = jnp.zeros((build_chunk, tgt_tile), jnp.float32)
            for idx, wgt in corners:                       # 4*points passes
                acc = acc + jnp.where(src == idx, wgt, 0.0)
            mt_ref[pl.ds(row0, build_chunk), :] = acc.astype(mt_dtype)
            return carry

        lax.fori_loop(0, n_chunks, chunk_body, 0)

    if gate_on_c:
        # mt is carried across the C axis; this is only valid because the C
        # axis is the innermost, sequentially iterated ("arbitrary") axis.
        c_axis = 3 - tgt_axis
        pl.when(pl.program_id(c_axis) == 0)(_build_interp_matrix)
    else:
        # tgt is innermost: the target tile changes every step, rebuild.
        _build_interp_matrix()

    feat = feat_ref[0]                                     # (c_tile, S_pad) f32
    tgt_start = pl.multiple_of(t_idx * tgt_tile, tgt_tile)
    # Residual kept separate and in f32 (not folded into mt) so the identity
    # term is exact even with bf16 MXU operands.
    feat_tgt = feat_ref[0, :, pl.ds(tgt_start, tgt_tile)]
    lhs = feat.astype(jnp.bfloat16) if use_bf16 else feat
    out_ref[0] = feat_tgt + jnp.dot(lhs, mt_ref[...],
                                    preferred_element_type=jnp.float32)


def _choose_tiles(C_pad8, S_pad128, c_tile, tgt_tile, use_bf16, vmem_cap):
    """Generation-aware tile + vmem_limit selection."""
    # Cap well below physical VMEM: v7x 64 MiB -> 56 MiB; v5e/v6e 128 -> 112.
    limit_cap = max(8 << 20, min(vmem_cap - (8 << 20), vmem_cap * 7 // 8))
    budget = max(limit_cap - (6 << 20), 2 << 20)
    mt_elt = 2 if use_bf16 else 4

    def est(ct, tt):
        S_pad = _round_up(S_pad128, tt)
        chunk = _pick_build_chunk(S_pad)
        return (2 * ct * S_pad * 4                       # feat double buffer
                + 2 * ct * tt * 4                        # out double buffer
                + 2 * 8 * tt * 4                         # box block (5 -> 8)
                + S_pad * tt * mt_elt                    # mt scratch
                + 4 * chunk * tt * 4                     # build temporaries
                + (ct * S_pad * 2 if use_bf16 else 0)    # bf16 cast of feat
                + ct * tt * 4)                           # matmul result temp

    if c_tile is None:
        ct = min(256, C_pad8)
        while ct > 8 and 2 * ct * S_pad128 * 4 > budget // 3:
            ct = _round_up(max(8, ct // 2), 8)
        c_tile = ct
    c_tile = _round_up(max(8, min(int(c_tile), C_pad8)), 8)

    if tgt_tile is None:
        tt = min(2048, S_pad128)
        while tt > 128 and est(c_tile, tt) > budget:
            tt -= 128
        tgt_tile = tt
    tgt_tile = max(128, min(int(tgt_tile), _round_up(S_pad128, 128)))
    assert tgt_tile % 128 == 0, "tgt_tile must be a multiple of 128"

    want = est(c_tile, tgt_tile) + (8 << 20)
    vmem_limit = int(min(limit_cap, max(want, min(32 << 20, limit_cap))))
    return c_tile, tgt_tile, vmem_limit


def _pick_grid_order(n_c, n_tgt, c_tile, S_pad, tgt_tile, points, grid_order):
    if grid_order in ("c_inner", "tgt_inner"):
        return grid_order
    if n_c <= 1 or n_tgt <= 1:
        # Orders are equivalent: the feat block index is constant across the
        # inner axis either way, so Pallas elides the re-DMA.
        return "c_inner"
    # c_inner re-reads the full feat row for every target tile:
    extra_dma_bytes = n_c * (n_tgt - 1) * c_tile * S_pad * 4
    # tgt_inner rebuilds the interpolation matrix for every C tile:
    extra_build_ops = (n_c - 1) * n_tgt * (4 * points) * 3 * S_pad * tgt_tile
    # ~1.2e12 B/s HBM vs ~3.5e12 VPU elem-ops/s -> compare in seconds.
    return ("tgt_inner"
            if extra_build_ops / 3.5e12 < extra_dma_bytes / 1.2e12
            else "c_inner")


def feature_refine(features, best_rbboxes, spatial_scale, points=1, *,
                   c_tile=None, tgt_tile=None, build_chunk=None,
                   grid_order="auto", use_bf16=True):
    """features: (N, C, H, W); best_rbboxes: (N, H, W, 5).  Returns f32 NCHW."""
    assert points in (1, 5)
    N, C, H, W = features.shape
    S = H * W

    S_pad128 = _round_up(S, 128)
    C_pad8 = _round_up(C, 8)
    vmem_cap = _vmem_capacity_bytes()
    c_tile, tgt_tile, vmem_limit = _choose_tiles(
        C_pad8, S_pad128, c_tile, tgt_tile, use_bf16, vmem_cap)
    S_pad = _round_up(S_pad128, tgt_tile)
    C_pad = _round_up(C_pad8, c_tile)
    build_chunk = _pick_build_chunk(S_pad, build_chunk)

    # Zero-pad; padded src rows/cols never get nonzero interpolation weight
    # and padded outputs are sliced off below.
    feat_flat = jnp.zeros((N, C_pad, S_pad), jnp.float32)
    feat_flat = feat_flat.at[:, :C, :S].set(
        features.reshape(N, C, S).astype(jnp.float32))
    box_t = jnp.zeros((N, 5, S_pad), jnp.float32)
    box_t = box_t.at[:, :, :S].set(
        best_rbboxes.reshape(N, S, 5).transpose(0, 2, 1).astype(jnp.float32))

    n_tgt = S_pad // tgt_tile
    n_c = C_pad // c_tile
    order = _pick_grid_order(n_c, n_tgt, c_tile, S_pad, tgt_tile, points,
                             grid_order)

    if order == "c_inner":
        # C innermost: mt amortized over channel tiles (rebuilt at c == 0).
        grid = (N, n_tgt, n_c)
        feat_map = lambda n, t, c: (n, c, 0)
        box_map = lambda n, t, c: (n, 0, t)
        out_map = lambda n, t, c: (n, c, t)
        tgt_axis, gate_on_c = 1, True
    else:
        # tgt innermost: feat block index constant across inner steps -> the
        # full source row is DMA'd once per (n, c); mt rebuilt every step.
        grid = (N, n_c, n_tgt)
        feat_map = lambda n, c, t: (n, c, 0)
        box_map = lambda n, c, t: (n, 0, t)
        out_map = lambda n, c, t: (n, c, t)
        tgt_axis, gate_on_c = 2, False
    # Innermost axis stays "arbitrary" (sequential); required for the mt
    # carry in c_inner mode, harmless in tgt_inner mode.
    semantics = ("parallel", "parallel", "arbitrary")

    kernel = functools.partial(
        _fr_kernel, H=H, W=W, spatial_scale=float(spatial_scale),
        points=points, tgt_tile=tgt_tile, build_chunk=build_chunk,
        tgt_axis=tgt_axis, gate_on_c=gate_on_c, use_bf16=use_bf16)
    mt_dtype = jnp.bfloat16 if use_bf16 else jnp.float32

    out = pl.pallas_call(
        kernel,
        out_shape=jax.ShapeDtypeStruct((N, C_pad, S_pad), jnp.float32),
        grid_spec=pltpu.PrefetchScalarGridSpec(
            num_scalar_prefetch=0,
            grid=grid,
            in_specs=[
                # full source row per channel tile
                pl.BlockSpec((1, c_tile, S_pad), feat_map),
                # boxes only for the current target tile
                pl.BlockSpec((1, 5, tgt_tile), box_map),
            ],
            out_specs=pl.BlockSpec((1, c_tile, tgt_tile), out_map),
            scratch_shapes=[pltpu.VMEM((S_pad, tgt_tile), mt_dtype)],
        ),
        compiler_params=pltpu.CompilerParams(
            dimension_semantics=semantics,
            vmem_limit_bytes=int(vmem_limit)),
    )(feat_flat, box_t)
    return out[:, :C, :S].reshape(N, C, H, W)


class FR:
    """JAX/Pallas analog of the PyTorch FR module (forward only)."""

    def __init__(self, spatial_scale, points=1):
        self.spatial_scale = float(spatial_scale)
        self.points = points

    def __call__(self, features, best_rbboxes, **kw):
        return feature_refine(features, best_rbboxes,
                              self.spatial_scale, self.points, **kw)

    def __repr__(self):
        return "FR(spatial_scale={}, points={})".format(
            self.spatial_scale, self.points)


def feature_refine_ref(features, best_rbboxes, spatial_scale, points=1):
    """Pure-JAX reference (gather based) for correctness checking."""
    N, C, H, W = features.shape
    S = H * W
    feat = features.reshape(N, C, S).astype(jnp.float32)
    box = best_rbboxes.reshape(N, S, 5).transpose(0, 2, 1).astype(jnp.float32)
    cx = box[:, 0, :] * spatial_scale
    cy = box[:, 1, :] * spatial_scale
    pxs, pys = [cx], [cy]
    if points == 5:
        w2 = box[:, 2, :] * spatial_scale * 0.5
        h2 = box[:, 3, :] * spatial_scale * 0.5
        ang = box[:, 4, :]
        cosa, sina = jnp.cos(ang), jnp.sin(ang)
        wx, wy = cosa * w2, sina * w2
        hx, hy = -sina * h2, cosa * h2
        pxs += [cx + wx + hx, cx - wx + hx, cx - wx - hx, cx + wx - hx]
        pys += [cy + wy + hy, cy - wy + hy, cy - wy - hy, cy + wy - hy]
    out = feat
    for px, py in zip(pxs, pys):
        for idx, wgt in _bilinear_corners(px, py, H, W):
            gathered = jnp.take_along_axis(feat, idx[:, None, :], axis=2)
            out = out + wgt[:, None, :] * gathered
    return out.reshape(N, C, H, W)


if __name__ == "__main__":
    key = jax.random.PRNGKey(0)
    N, C, H, W = 2, 16, 16, 16
    spatial_scale = 0.25

    k1, k2, k3, k4, k5 = jax.random.split(key, 5)
    features = jax.random.normal(k1, (N, C, H, W), jnp.float32)
    # Rotated boxes in input-image coordinates: (x_ctr, y_ctr, w, h, angle)
    cx = jax.random.uniform(k2, (N, H, W, 1), minval=0.0, maxval=W / spatial_scale)
    cy = jax.random.uniform(k3, (N, H, W, 1), minval=0.0, maxval=H / spatial_scale)
    wh = jax.random.uniform(k4, (N, H, W, 2), minval=4.0, maxval=32.0)
    ang = jax.random.uniform(k5, (N, H, W, 1), minval=-3.14159, maxval=3.14159)
    best_rbboxes = jnp.concatenate([cx, cy, wh, ang], axis=-1)

    for points in (1, 5):
        ref = feature_refine_ref(features, best_rbboxes, spatial_scale, points)

        # Exact path: f32 MXU operands, auto tiles.
        out_f32 = jax.block_until_ready(
            feature_refine(features, best_rbboxes, spatial_scale, points,
                           use_bf16=False))
        assert out_f32.shape == features.shape and out_f32.dtype == jnp.float32
        assert jnp.allclose(out_f32, ref, atol=1e-3, rtol=1e-3), (
            "points=%d (f32) mismatch" % points)

        # Default path: bf16 MXU operands (f32 residual), relaxed tolerance.
        fr = FR(spatial_scale, points=points)
        out_bf = jax.block_until_ready(fr(features, best_rbboxes))
        assert jnp.allclose(out_bf, ref, atol=1e-1, rtol=5e-2), (
            "points=%d (bf16) mismatch" % points)

        # Explicit small tiles: exercises multi-tile tgt/C axes, the chunked
        # (fori_loop) mt build, and both grid orders.
        for order in ("c_inner", "tgt_inner"):
            out_t = jax.block_until_ready(
                feature_refine(features, best_rbboxes, spatial_scale, points,
                               c_tile=8, tgt_tile=128, build_chunk=128,
                               grid_order=order, use_bf16=False))
            assert jnp.allclose(out_t, ref, atol=1e-3, rtol=1e-3), (
                "points=%d (%s tiled) mismatch" % (points, order))

    print("KERNEL_OK")
</pallas_src>

<mosaic_0001>
module attributes {stable_mosaic.version = 11 : i64} {
  func.func @_fr_kernel(%arg0: i32, %arg1: i32, %arg2: i32, %arg3: memref<1x16x256xf32, #tpu.memory_space<vmem>>, %arg4: memref<1x5x256xf32, #tpu.memory_space<vmem>>, %arg5: memref<1x16x256xf32, #tpu.memory_space<vmem>>, %arg6: memref<256x256xf32, #tpu.memory_space<vmem>>) attributes {dimension_semantics = [#tpu.dimension_semantics<parallel>, #tpu.dimension_semantics<parallel>, #tpu.dimension_semantics<arbitrary>], iteration_bounds = array<i64: 2, 1, 1>, scalar_prefetch = 0 : i64, scratch_operands = 1 : i64, tpu.core_type = #tpu.core_type<tc>, window_params = [{transform_indices = @transform_0, window_bounds = array<i64: 1, 16, 256>}, {transform_indices = @transform_1, window_bounds = array<i64: 1, 5, 256>}, {transform_indices = @transform_2, window_bounds = array<i64: 1, 16, 256>}]} {
    %c0_i32 = arith.constant 0 : i32
    %0 = arith.cmpi eq, %arg2, %c0_i32 : i32
    %1 = arith.extui %0 : i1 to i32
    %c0_i32_0 = arith.constant 0 : i32
    %2 = arith.cmpi ne, %1, %c0_i32_0 : i32
    scf.if %2 {
      %c0_10 = arith.constant 0 : index
      %c0_11 = arith.constant 0 : index
      %c0_12 = arith.constant 0 : index
      %16 = vector.load %arg4[%c0_10, %c0_11, %c0_12] : memref<1x5x256xf32, #tpu.memory_space<vmem>>, vector<1x5x256xf32>
      %17 = vector.shape_cast %16 : vector<1x5x256xf32> to vector<5x256xf32>
      %18 = vector.extract_strided_slice %17 {offsets = [0, 0], sizes = [1, 256], strides = [1, 1]} : vector<5x256xf32> to vector<1x256xf32>
      %cst_13 = arith.constant 2.500000e-01 : f32
      %19 = vector.broadcast %cst_13 : f32 to vector<1x256xf32>
      %20 = arith.mulf %18, %19 : vector<1x256xf32>
      %21 = vector.extract_strided_slice %17 {offsets = [1, 0], sizes = [1, 256], strides = [1, 1]} : vector<5x256xf32> to vector<1x256xf32>
      %cst_14 = arith.constant 2.500000e-01 : f32
      %22 = vector.broadcast %cst_14 : f32 to vector<1x256xf32>
      %23 = arith.mulf %21, %22 : vector<1x256xf32>
      %cst_15 = arith.constant -1.000000e+00 : f32
      %24 = vector.broadcast %cst_15 : f32 to vector<1x256xf32>
      %25 = arith.cmpf oge, %23, %24 : vector<1x256xf32>
      %cst_16 = arith.constant 1.600000e+01 : f32
      %26 = vector.broadcast %cst_16 : f32 to vector<1x256xf32>
      %27 = arith.cmpf ole, %23, %26 : vector<1x256xf32>
      %28 = arith.andi %25, %27 : vector<1x256xi1>
      %cst_17 = arith.constant -1.000000e+00 : f32
      %29 = vector.broadcast %cst_17 : f32 to vector<1x256xf32>
      %30 = arith.cmpf oge, %20, %29 : vector<1x256xf32>
      %31 = arith.andi %28, %30 : vector<1x256xi1>
      %cst_18 = arith.constant 1.600000e+01 : f32
      %32 = vector.broadcast %cst_18 : f32 to vector<1x256xf32>
      %33 = arith.cmpf ole, %20, %32 : vector<1x256xf32>
      %34 = arith.andi %31, %33 : vector<1x256xi1>
      %cst_19 = arith.constant 0.000000e+00 : f32
      %35 = vector.broadcast %cst_19 : f32 to vector<1x256xf32>
      %36 = arith.maximumf %23, %35 : vector<1x256xf32>
      %cst_20 = arith.constant 0.000000e+00 : f32
      %37 = vector.broadcast %cst_20 : f32 to vector<1x256xf32>
      %38 = arith.maximumf %20, %37 : vector<1x256xf32>
      %39 = math.floor %36 : vector<1x256xf32>
      %40 = arith.fptosi %39 : vector<1x256xf32> to vector<1x256xi32>
      %41 = math.floor %38 : vector<1x256xf32>
      %42 = arith.fptosi %41 : vector<1x256xf32> to vector<1x256xi32>
      %c15_i32 = arith.constant 15 : i32
      %43 = vector.broadcast %c15_i32 : i32 to vector<1x256xi32>
      %44 = arith.cmpi sge, %40, %43 : vector<1x256xi32>
      %c15_i32_21 = arith.constant 15 : i32
      %45 = vector.broadcast %c15_i32_21 : i32 to vector<1x256xi32>
      %46 = arith.cmpi sge, %42, %45 : vector<1x256xi32>
      %c15_i32_22 = arith.constant 15 : i32
      %47 = vector.broadcast %c15_i32_22 : i32 to vector<1x256xi32>
      %48 = arith.select %44, %47, %40 : vector<1x256xi1>, vector<1x256xi32>
      %c15_i32_23 = arith.constant 15 : i32
      %49 = vector.broadcast %c15_i32_23 : i32 to vector<1x256xi32>
      %50 = arith.select %46, %49, %42 : vector<1x256xi1>, vector<1x256xi32>
      %c1_i32 = arith.constant 1 : i32
      %51 = vector.broadcast %c1_i32 : i32 to vector<1x256xi32>
      %52 = arith.addi %48, %51 : vector<1x256xi32>
      %c15_i32_24 = arith.constant 15 : i32
      %53 = vector.broadcast %c15_i32_24 : i32 to vector<1x256xi32>
      %54 = arith.select %44, %53, %52 : vector<1x256xi1>, vector<1x256xi32>
      %c1_i32_25 = arith.constant 1 : i32
      %55 = vector.broadcast %c1_i32_25 : i32 to vector<1x256xi32>
      %56 = arith.addi %50, %55 : vector<1x256xi32>
      %c15_i32_26 = arith.constant 15 : i32
      %57 = vector.broadcast %c15_i32_26 : i32 to vector<1x256xi32>
      %58 = arith.select %46, %57, %56 : vector<1x256xi1>, vector<1x256xi32>
      %59 = arith.sitofp %48 : vector<1x256xi32> to vector<1x256xf32>
      %60 = arith.select %44, %59, %36 : vector<1x256xi1>, vector<1x256xf32>
      %61 = arith.sitofp %50 : vector<1x256xi32> to vector<1x256xf32>
      %62 = arith.select %46, %61, %38 : vector<1x256xi1>, vector<1x256xf32>
      %63 = arith.sitofp %48 : vector<1x256xi32> to vector<1x256xf32>
      %64 = arith.subf %60, %63 : vector<1x256xf32>
      %65 = arith.sitofp %50 : vector<1x256xi32> to vector<1x256xf32>
      %66 = arith.subf %62, %65 : vector<1x256xf32>
      %cst_27 = arith.constant 1.000000e+00 : f32
      %67 = vector.broadcast %cst_27 : f32 to vector<1x256xf32>
      %68 = arith.subf %67, %64 : vector<1x256xf32>
      %cst_28 = arith.constant 1.000000e+00 : f32
      %69 = vector.broadcast %cst_28 : f32 to vector<1x256xf32>
      %70 = arith.subf %69, %66 : vector<1x256xf32>
      %71 = arith.extui %34 : vector<1x256xi1> to vector<1x256xi32>
      %72 = arith.sitofp %71 : vector<1x256xi32> to vector<1x256xf32>
      %c16_i32 = arith.constant 16 : i32
      %73 = vector.broadcast %c16_i32 : i32 to vector<1x256xi32>
      %74 = arith.muli %48, %73 : vector<1x256xi32>
      %75 = arith.addi %74, %50 : vector<1x256xi32>
      %76 = arith.mulf %68, %70 : vector<1x256xf32>
      %77 = arith.mulf %76, %72 : vector<1x256xf32>
      %c16_i32_29 = arith.constant 16 : i32
      %78 = vector.broadcast %c16_i32_29 : i32 to vector<1x256xi32>
      %79 = arith.muli %48, %78 : vector<1x256xi32>
      %80 = arith.addi %79, %58 : vector<1x256xi32>
      %81 = arith.mulf %68, %66 : vector<1x256xf32>
      %82 = arith.mulf %81, %72 : vector<1x256xf32>
      %c16_i32_30 = arith.constant 16 : i32
      %83 = vector.broadcast %c16_i32_30 : i32 to vector<1x256xi32>
      %84 = arith.muli %54, %83 : vector<1x256xi32>
      %85 = arith.addi %84, %50 : vector<1x256xi32>
      %86 = arith.mulf %64, %70 : vector<1x256xf32>
      %87 = arith.mulf %86, %72 : vector<1x256xf32>
      %c16_i32_31 = arith.constant 16 : i32
      %88 = vector.broadcast %c16_i32_31 : i32 to vector<1x256xi32>
      %89 = arith.muli %54, %88 : vector<1x256xi32>
      %90 = arith.addi %89, %58 : vector<1x256xi32>
      %91 = arith.mulf %64, %66 : vector<1x256xf32>
      %92 = arith.mulf %91, %72 : vector<1x256xf32>
      %c0_i32_32 = arith.constant 0 : i32
      %c256_i32_33 = arith.constant 256 : i32
      %93 = arith.muli %c0_i32_32, %c256_i32_33 : i32
      %94 = tpu.assume_multiple %93, 256 : i32
      %95 = tpu.iota {dimensions = array<i32: 0>} : vector<256x1xi32>
      %c256_i32_34 = arith.constant 256 : i32
      %96 = arith.muli %c0_i32_32, %c256_i32_34 : i32
      %97 = vector.broadcast %96 : i32 to vector<256x1xi32>
      %98 = arith.addi %95, %97 : vector<256x1xi32>
      %cst_35 = arith.constant 0.000000e+00 : f32
      %99 = vector.broadcast %cst_35 : f32 to vector<256x256xf32>
      %100 = vector.broadcast %98 : vector<256x1xi32> to vector<256x256xi32>
      %101 = vector.broadcast %75 : vector<1x256xi32> to vector<256x256xi32>
      %102 = arith.cmpi eq, %100, %101 : vector<256x256xi32>
      %cst_36 = arith.constant 0.000000e+00 : f32
      %103 = vector.shape_cast %77 : vector<1x256xf32> to vector<1x256xf32>
      %104 = vector.broadcast %103 : vector<1x256xf32> to vector<256x256xf32>
      %105 = vector.broadcast %cst_36 : f32 to vector<256x256xf32>
      %106 = arith.select %102, %104, %105 : vector<256x256xi1>, vector<256x256xf32>
      %107 = arith.addf %99, %106 : vector<256x256xf32>
      %108 = vector.broadcast %98 : vector<256x1xi32> to vector<256x256xi32>
      %109 = vector.broadcast %80 : vector<1x256xi32> to vector<256x256xi32>
      %110 = arith.cmpi eq, %108, %109 : vector<256x256xi32>
      %cst_37 = arith.constant 0.000000e+00 : f32
      %111 = vector.shape_cast %82 : vector<1x256xf32> to vector<1x256xf32>
      %112 = vector.broadcast %111 : vector<1x256xf32> to vector<256x256xf32>
      %113 = vector.broadcast %cst_37 : f32 to vector<256x256xf32>
      %114 = arith.select %110, %112, %113 : vector<256x256xi1>, vector<256x256xf32>
      %115 = arith.addf %107, %114 : vector<256x256xf32>
      %116 = vector.broadcast %98 : vector<256x1xi32> to vector<256x256xi32>
      %117 = vector.broadcast %85 : vector<1x256xi32> to vector<256x256xi32>
      %118 = arith.cmpi eq, %116, %117 : vector<256x256xi32>
      %cst_38 = arith.constant 0.000000e+00 : f32
      %119 = vector.shape_cast %87 : vector<1x256xf32> to vector<1x256xf32>
      %120 = vector.broadcast %119 : vector<1x256xf32> to vector<256x256xf32>
      %121 = vector.broadcast %cst_38 : f32 to vector<256x256xf32>
      %122 = arith.select %118, %120, %121 : vector<256x256xi1>, vector<256x256xf32>
      %123 = arith.addf %115, %122 : vector<256x256xf32>
      %124 = vector.broadcast %98 : vector<256x1xi32> to vector<256x256xi32>
      %125 = vector.broadcast %90 : vector<1x256xi32> to vector<256x256xi32>
      %126 = arith.cmpi eq, %124, %125 : vector<256x256xi32>
      %cst_39 = arith.constant 0.000000e+00 : f32
      %127 = vector.shape_cast %92 : vector<1x256xf32> to vector<1x256xf32>
      %128 = vector.broadcast %127 : vector<1x256xf32> to vector<256x256xf32>
      %129 = vector.broadcast %cst_39 : f32 to vector<256x256xf32>
      %130 = arith.select %126, %128, %129 : vector<256x256xi1>, vector<256x256xf32>
      %131 = arith.addf %123, %130 : vector<256x256xf32>
      %132 = arith.index_cast %94 : i32 to index
      %c0_40 = arith.constant 0 : index
      %133 = vector.load %arg6[%132, %c0_40] : memref<256x256xf32, #tpu.memory_space<vmem>>, vector<256x256xf32>
      tpu.vector_store %arg6[%132, %c0_40], %131 {strides = array<i32>} : memref<256x256xf32, #tpu.memory_space<vmem>>, vector<256x256xf32>,
      %c1_i32_41 = arith.constant 1 : i32
    } else {
    }
    %c0 = arith.constant 0 : index
    %c0_1 = arith.constant 0 : index
    %c0_2 = arith.constant 0 : index
    %3 = vector.load %arg3[%c0, %c0_1, %c0_2] : memref<1x16x256xf32, #tpu.memory_space<vmem>>, vector<1x16x256xf32>
    %4 = vector.shape_cast %3 : vector<1x16x256xf32> to vector<16x256xf32>
    %c256_i32 = arith.constant 256 : i32
    %5 = arith.muli %arg1, %c256_i32 : i32
    %6 = tpu.assume_multiple %5, 256 : i32
    %c0_3 = arith.constant 0 : index
    %c0_4 = arith.constant 0 : index
    %7 = arith.index_cast %6 : i32 to index
    %8 = vector.load %arg3[%c0_3, %c0_4, %7] : memref<1x16x256xf32, #tpu.memory_space<vmem>>, vector<1x16x256xf32>
    %9 = vector.shape_cast %8 : vector<1x16x256xf32> to vector<16x256xf32>
    %c0_5 = arith.constant 0 : index
    %c0_6 = arith.constant 0 : index
    %10 = vector.load %arg6[%c0_5, %c0_6] : memref<256x256xf32, #tpu.memory_space<vmem>>, vector<256x256xf32>
    %cst = arith.constant dense<0.000000e+00> : vector<16x256xf32>
    %11 = tpu.matmul %4, %10, %cst {dimension_numbers = #tpu.dot_dimension_numbers<[1], [0], [0], [1], [0, 0, 1, 1], [], []>} : vector<16x256xf32>, vector<256x256xf32>, vector<16x256xf32> -> vector<16x256xf32>
    %12 = arith.addf %9, %11 : vector<16x256xf32>
    %c0_7 = arith.constant 0 : index
    %c0_8 = arith.constant 0 : index
    %c0_9 = arith.constant 0 : index
    %13 = vector.load %arg5[%c0_7, %c0_8, %c0_9] : memref<1x16x256xf32, #tpu.memory_space<vmem>>, vector<1x16x256xf32>
    %14 = vector.shape_cast %13 : vector<1x16x256xf32> to vector<16x256xf32>
    %15 = vector.shape_cast %12 : vector<16x256xf32> to vector<1x16x256xf32>
    tpu.vector_store %arg5[%c0_7, %c0_8, %c0_9], %15 {strides = array<i32>} : memref<1x16x256xf32, #tpu.memory_space<vmem>>, vector<1x16x256xf32>,
    return
  }
  func.func @transform_0(%arg0: i32, %arg1: i32, %arg2: i32) -> (i32, i32, i32) {
    %c0_i32 = arith.constant 0 : i32
    %c0_i32_0 = arith.constant 0 : i32
    return %arg0, %arg2, %c0_i32 : i32, i32, i32
  }
  func.func @transform_1(%arg0: i32, %arg1: i32, %arg2: i32) -> (i32, i32, i32) {
    %c0_i32 = arith.constant 0 : i32
    %c0_i32_0 = arith.constant 0 : i32
    return %arg0, %c0_i32, %arg1 : i32, i32, i32
  }
  func.func @transform_2(%arg0: i32, %arg1: i32, %arg2: i32) -> (i32, i32, i32) {
    %c0_i32 = arith.constant 0 : i32
    return %arg0, %arg2, %arg1 : i32, i32, i32
  }
}

</mosaic_0001>

<llo_original>
// kernel: tpu_custom_call.1
$region0: #{tpu_custom_call.1}
  #allocation0 [shape = 'u32[]', space=smem, size = 0x4, offset = 0x4, fixed_abs, tag = 'smem constant byte address 0x4 - core index']
  #allocation1 [shape = 'u32[144,128]{1,0:T(1,128)}', space=vmem, size = 0x12000, scoped, tag = 'internal scratch']
  #allocation2 [shape = 'f32[256,256]{1,0:T(8,128)}', space=vmem, size = 0x40000, scoped, tag = 'scratch operand']
  %s0 = inlined_call_operand.hbm [shape: f32[2,16,256], index: 0, kind: input, shape index: {}]
  %s1 = inlined_call_operand.vmem [shape: f32[2,5,256], index: 1, kind: input, shape index: {}]
  %s2 = inlined_call_operand.hbm [shape: f32[2,16,256], index: 2, kind: output, shape index: {}]
  %s3 = sld [smem:[#allocation0]]
  $region49: #{tpu_custom_call.1} parent=0
    _
  %s5 = ssub.s32 1, %s3
  %s6 = scalar_select 0, %s5, %s3
  $region1: #{tpu_custom_call.1} parent=0
    #allocation3 [shape = 'u8[32768]{0}', space=vmem, size = 0x8000, scoped, tag = 'input window, operand 0']
    #allocation4 [shape = 's32[2]{0}', space=sflag, size = 0x8, scoped, tag = 'scoped memory for tpu_custom_call.1']
    #allocation5 [shape = 's32[2]{0}', space=sflag, size = 0x8, scoped, tag = 'scoped memory for tpu_custom_call.1']
    #allocation6 [shape = 'u8[32768]{0}', space=vmem, size = 0x8000, scoped, tag = 'output window, operand 0']
    %7 = vsyncpa [#allocation4], 0
    %s8 = scalar_lea.sflag [#allocation4], 1
    %9 = vsyncpa %s8, 0
    %10 = vsyncpa [#allocation5], 0
    %s11 = scalar_lea.sflag [#allocation5], 1
    %12 = vsyncpa %s11, 0
    loop: start=0, step=1, limit=4
    $region2: #{tpu_custom_call.1} parent=1 // loop_pre_header
      _
    $region3: #{tpu_custom_call.1} parent=1 // loop_header
      %s14 = sphi 0, %s18
      %p15 = scmp.ge.s32.totalorder %s14, 4
      %s21 = sphi 0, %s40
      %s22 = sphi 0, %s36
      %s23 = sphi 0, %s32
      %s24 = sphi 0, %s21
      %s25 = sphi 0, %s22
      %s26 = sphi 0, %s23
      %s27 = sphi 0, %s24
      %s28 = sphi 0, %s25
      %s29 = sphi 0, %s26
      %s45 = sphi 0, %s47
      %s48 = sphi 0, %s45
      %s49 = sphi 0, %s48
      %s65 = sphi 0, %s49
      %s73 = sphi 0, %s75
      %s76 = sphi 0, %s73
      %s77 = sphi 0, %s76
      %s93 = sphi 0, %s77
      %s103 = sphi 0, %s105
      %s106 = sphi 0, %s103
      %s107 = sphi 0, %s106
      %s123 = sphi 0, %s107
    $region4: #{tpu_custom_call.1} parent=1 // loop_header_branch
      %17 = sbr.rel (%p15) target = $region8
    $region5: #{tpu_custom_call.1} parent=1 // loop_body
      %s19 = ssub.s32 %s14, 1
      %s20 = ssub.s32 %s14, 2
      %s30 = sadd.s32 1, %s23
      %p31 = scmp.ge.s32.totalorder %s30, 1
      %s32 = scalar_select %p31, 0, %s30
      %s33 = sadd.s32 1, %s22
      %s34 = scalar_select %p31, %s33, %s22
      %p35 = scmp.ge.s32.totalorder %s34, 1
      %s36 = scalar_select %p35, 0, %s34
      %s37 = sadd.s32 1, %s21
      %s38 = scalar_select %p35, %s37, %s21
      %p39 = scmp.ge.s32.totalorder %s38, 2
      %s40 = scalar_select %p39, 0, %s38
      %s41 = ssub.s32 %s21, %s40
      %s42 = ssub.s32 %s23, %s32
      %s43 = sor.u32 %s41, %s42
      %p44 = scmp.eq.s32.totalorder %s43, 0
      %s46 = sadd.s32 %s45, 1
      %s47 = scalar_select %p44, %s45, %s46
      %p50 = pneg %p44
      %p51 = scmp.eq.s32.totalorder %s14, 1
      %p52 = por %p50, %p51
      %p53 = scmp.ne.s32.totalorder %s45, %s48
      %p54 = scmp.eq.s32.totalorder %s14, 0
      %p55 = por %p53, %p54
      %p56 = scmp.ne.s32.totalorder %s45, %s48
      %p57 = scmp.eq.s32.totalorder %s19, 1
      %p58 = por %p56, %p57
      %p59 = scmp.ne.s32.totalorder %s48, %s49
      %p60 = scmp.eq.s32.totalorder %s19, 0
      %p61 = por %p59, %p60
      %p62 = scmp.ne.s32.totalorder %s48, %s49
      %p63 = scmp.eq.s32.totalorder %s20, 1
      %p64 = por %p62, %p63
      %p66 = scmp.ne.s32.totalorder %s49, %s65
      %p67 = scmp.eq.s32.totalorder %s20, 0
      %p68 = por %p66, %p67
      %s69 = ssub.s32 %s21, %s40
      %s70 = ssub.s32 %s22, %s36
      %s71 = sor.u32 %s69, %s70
      %p72 = scmp.eq.s32.totalorder %s71, 0
      %s74 = sadd.s32 %s73, 1
      %s75 = scalar_select %p72, %s73, %s74
      %p78 = pneg %p72
      %p79 = scmp.eq.s32.totalorder %s14, 1
      %p80 = por %p78, %p79
      %p81 = scmp.ne.s32.totalorder %s73, %s76
      %p82 = scmp.eq.s32.totalorder %s14, 0
      %p83 = por %p81, %p82
      %p84 = scmp.ne.s32.totalorder %s73, %s76
      %p85 = scmp.eq.s32.totalorder %s19, 1
      %p86 = por %p84, %p85
      %p87 = scmp.ne.s32.totalorder %s76, %s77
      %p88 = scmp.eq.s32.totalorder %s19, 0
      %p89 = por %p87, %p88
      %p90 = scmp.ne.s32.totalorder %s76, %s77
      %p91 = scmp.eq.s32.totalorder %s20, 1
      %p92 = por %p90, %p91
      %p94 = scmp.ne.s32.totalorder %s77, %s93
      %p95 = scmp.eq.s32.totalorder %s20, 0
      %p96 = por %p94, %p95
      %s97 = ssub.s32 %s21, %s40
      %s98 = ssub.s32 %s23, %s32
      %s99 = sor.u32 %s97, %s98
      %s100 = ssub.s32 %s22, %s36
      %s101 = sor.u32 %s99, %s100
      %p102 = scmp.eq.s32.totalorder %s101, 0
      %s104 = sadd.s32 %s103, 1
      %s105 = scalar_select %p102, %s103, %s104
      %p108 = pneg %p102
      %p109 = scmp.eq.s32.totalorder %s14, 1
      %p110 = por %p108, %p109
      %p111 = scmp.ne.s32.totalorder %s103, %s106
      %p112 = scmp.eq.s32.totalorder %s14, 0
      %p113 = por %p111, %p112
      %p114 = scmp.ne.s32.totalorder %s103, %s106
      %p115 = scmp.eq.s32.totalorder %s19, 1
      %p116 = por %p114, %p115
      %p117 = scmp.ne.s32.totalorder %s106, %s107
      %p118 = scmp.eq.s32.totalorder %s19, 0
      %p119 = por %p117, %p118
      %p120 = scmp.ne.s32.totalorder %s106, %s107
      %p121 = scmp.eq.s32.totalorder %s20, 1
      %p122 = por %p120, %p121
      %p124 = scmp.ne.s32.totalorder %s107, %s123
      %p125 = scmp.eq.s32.totalorder %s20, 0
      %p126 = por %p124, %p125
      %p127 = scmp.le.s32.totalorder 1, %s14
      %p128 = scmp.lt.s32.totalorder %s14, 3
      %p129 = pnand %p127, %p128
      %p130 = pneg %p129
      // Predicated region
      $region9: #{tpu_custom_call.1} parent=5 // pred_check
        _
      $region10: #{tpu_custom_call.1} parent=5 // pred_check_branch
        %132 = sbr.rel (%p129) target = $region12
      $region11: #{tpu_custom_call.1} parent=5 // pred_region
        %s133 = ssub.s32 %s14, 1
      $region12: #{tpu_custom_call.1} parent=5 // pred_fallthru
        _
      %p134 = scmp.lt.s32.totalorder %s14, 2
      // Predicated region
      $region13: #{tpu_custom_call.1} parent=5 // pred_check
        %p135 = pneg %p134
      $region14: #{tpu_custom_call.1} parent=5 // pred_check_branch
        %137 = sbr.rel (%p135) target = $region16
      $region15: #{tpu_custom_call.1} parent=5 // pred_region
        // Predicated region
        $region17: #{tpu_custom_call.1} parent=15 // pred_check
          %p138 = pneg %p55
        $region18: #{tpu_custom_call.1} parent=15 // pred_check_branch
          %140 = sbr.rel (%p138) target = $region20
        $region19: #{tpu_custom_call.1} parent=15 // pred_region
          %s141 = sand.u32 %s45, 1
          %s142 = scalar_lea.sflag [#allocation4], %s141
          %s143 = sand.u32 %s45, 1
          %s144 = smul.addr %s143, 32
          %s145 = scalar_lea.vmem [#allocation3], %s144
          %s146 = smul.u32 2, %s23
          %s148 = ssub.s32 512, 512
          %149 = vsyncadd %s142, %s148
          %s150 = smul.addr %s146, 2
          %s151 = smul.addr %s21, 4
          %s152 = sadd.s32 %s150, %s151
          %s153 = smul.addr %s152, 128
          %s154 = scalar_lea.hbm %s0, %s153
          %s155 = sshll.u32 %s145, 4
          %s156 = int_to_ptr.vmem [resolvable:$true] %s155
          %161 = dma.hbm_to_vmem [thread:$0]  %s154, 512, %s156, %s142, 256, 256, 16
        $region20: #{tpu_custom_call.1} parent=15 // pred_fallthru
          _
        // Predicated region
        $region21: #{tpu_custom_call.1} parent=15 // pred_check
          %p162 = pneg %p83
        $region22: #{tpu_custom_call.1} parent=15 // pred_check_branch
          %164 = sbr.rel (%p162) target = $region24
        $region23: #{tpu_custom_call.1} parent=15 // pred_region
          %s165 = smul.u32 2, %s22
          %p166 = scmp.lt.s32.totalorder %s21, 1
          %s167 = scalar_select %p166, %s21, 1
          %p168 = scmp.lt.s32.totalorder %s165, 1
          %s169 = scalar_select %p168, %s165, 1
          %s170 = smul.addr %s167, 2
          %s171 = sadd.s32 %s169, %s170
          %s172 = smul.addr %s171, 8
          %s173 = scalar_lea.vmem %s1, %s172
          %s174 = smul.u32 2, %s22
        $region24: #{tpu_custom_call.1} parent=15 // pred_fallthru
          _
      $region16: #{tpu_custom_call.1} parent=5 // pred_fallthru
        _
      %p175 = scmp.le.s32.totalorder 1, %s14
      %p176 = scmp.lt.s32.totalorder %s14, 3
      %p177 = pnand %p175, %p176
      %p178 = pneg %p177
      // Predicated region
      $region25: #{tpu_custom_call.1} parent=5 // pred_check
        _
      $region26: #{tpu_custom_call.1} parent=5 // pred_check_branch
        %180 = sbr.rel (%p177) target = $region28
      $region27: #{tpu_custom_call.1} parent=5 // pred_region
        %s181 = ssub.s32 %s14, 1
        %s182 = sand.u32 %s48, 1
        %s183 = scalar_lea.sflag [#allocation4], %s182
        %s184 = sand.u32 %s48, 1
        %s185 = smul.addr %s184, 32
        %s186 = scalar_lea.vmem [#allocation3], %s185
        // Predicated region
        $region29: #{tpu_custom_call.1} parent=27 // pred_check
          %p187 = pneg %p61
        $region30: #{tpu_custom_call.1} parent=27 // pred_check_branch
          %189 = sbr.rel (%p187) target = $region32
        $region31: #{tpu_custom_call.1} parent=27 // pred_region
          %190 = dma.done %s183, 512
        $region32: #{tpu_custom_call.1} parent=27 // pred_fallthru
          _
        %s191 = sand.u32 %s48, 1
        %s192 = scalar_lea.sflag [#allocation4], %s191
        %s193 = sand.u32 %s48, 1
        %s194 = smul.addr %s193, 32
        %s195 = scalar_lea.vmem [#allocation3], %s194
        %p196 = pneg %p61
        %p197 = pneg %p58
        %s198 = smul.u32 2, %s25
        %p199 = scmp.lt.s32.totalorder %s24, 1
        %s200 = scalar_select %p199, %s24, 1
        %p201 = scmp.lt.s32.totalorder %s198, 1
        %s202 = scalar_select %p201, %s198, 1
        %s203 = smul.addr %s200, 2
        %s204 = sadd.s32 %s202, %s203
        %s205 = smul.addr %s204, 8
        %s206 = scalar_lea.vmem %s1, %s205
        %p207 = pneg %p89
        %p208 = pneg %p86
        %p209 = pneg %p119
        %p210 = pneg %p116
        %s211 = sand.u32 %s106, 1
        %s212 = scalar_lea.sflag [#allocation5], %s211
        %s213 = sand.u32 %s106, 1
        %s214 = smul.addr %s213, 32
        %s215 = scalar_lea.vmem [#allocation6], %s214
        %s216 = smul.u32 2, %s26
        %s217 = smul.u32 2, %s25
        %p218 = scmp.lt.s32.totalorder %s24, 1
        %s219 = scalar_select %p218, %s24, 1
        %p220 = scmp.lt.s32.totalorder %s217, 1
        %s221 = scalar_select %p220, %s217, 1
        %s222 = smul.addr %s219, 2
        %s223 = sadd.s32 %s221, %s222
        %s224 = smul.addr %s223, 8
        %s225 = scalar_lea.vmem %s1, %s224
        %s226 = smul.u32 2, %s25
        %s227 = smul.u32 2, %s26
        %s228 = smul.u32 2, %s25
        %p229 = scmp.eq.s32.totalorder %s26, 0
        // Predicated region
        $region33: #{tpu_custom_call.1} parent=27 // pred_check
          %p230 = pneg %p229
        $region34: #{tpu_custom_call.1} parent=27 // pred_check_branch
          %232 = sbr.rel (%p230) target = $region36
        $region35: #{tpu_custom_call.1} parent=27 // pred_region
          %v233 = vld [vmem:[%s225] sm:$0x1f]
          %v234 = vld [vmem:[%s225 + $0x8] sm:$0x1f]
          %v235 = vmul.f32 %v233, 0.25
          %v236 = vmul.f32 %v234, 0.25
          %vm237 = vcmp.ge.f32.partialorder %v235, -1.0
          %vm238 = vcmp.ge.f32.partialorder %v236, -1.0
          %vm239 = vcmp.le.f32.partialorder %v235, 16.0
          %vm240 = vcmp.le.f32.partialorder %v236, 16.0
          %vm241 = vmand %vm237, %vm239
          %vm242 = vmand %vm238, %vm240
          %v243 = vsel %vm237, 1, 0
          %v244 = vsel %vm238, 1, 0
          %v245 = vrot.slane %v243, 7
          %v246 = vrot.slane %v244, 7
          %vm247 = vcmp.ne.s32.totalorder %v245, 0
          %vm248 = vcmp.ne.s32.totalorder %v246, 0
          %vm249 = vmand %vm241, %vm247
          %vm250 = vmand %vm242, %vm248
          %v251 = vsel %vm239, 1, 0
          %v252 = vsel %vm240, 1, 0
          %v253 = vrot.slane %v251, 7
          %v254 = vrot.slane %v252, 7
          %vm255 = vcmp.ne.s32.totalorder %v253, 0
          %vm256 = vcmp.ne.s32.totalorder %v254, 0
          %vm257 = vmand %vm249, %vm255
          %vm258 = vmand %vm250, %vm256
          %v259 = vmax.f32 %v235, 0.0
          %v260 = vmax.f32 %v236, 0.0
          %v261 = vfloor.f32 %v259
          %v262 = vfloor.f32 %v260
          %v263 = vcvt.f32.s32.to.zero.pseudo %v261
          %v264 = vcvt.f32.s32.to.zero.pseudo %v262
          %vm265 = vcmp.ge.s32.totalorder %v263, 15
          %vm266 = vcmp.ge.s32.totalorder %v264, 15
          %v267 = vsel %vm265, 15, %v263
          %v268 = vsel %vm266, 15, %v264
          %v269 = vadd.s32 %v267, 1
          %v270 = vadd.s32 %v268, 1
          %v271 = vsel %vm265, 15, %v269
          %v272 = vsel %vm266, 15, %v270
          %v273 = vcvt.s32.f32 %v267
          %v274 = vcvt.s32.f32 %v268
          %v275 = vsel %vm265, %v273, %v259
          %v276 = vsel %vm266, %v274, %v260
          %v277 = vsub.f32 %v275, %v273
          %v278 = vsub.f32 %v276, %v274
          %v279 = vsub.f32 1.0, %v277
          %v280 = vsub.f32 1.0, %v278
          %v281 = vsel %vm257, 1, 0
          %v282 = vsel %vm258, 1, 0
          %v283 = vcvt.s32.f32 %v281
          %v284 = vcvt.s32.f32 %v282
          %v285 = vmul.u32 %v267, 16
          %v286 = vmul.u32 %v268, 16
          %v287 = vrot.slane %v267, 7
          %v288 = vrot.slane %v268, 7
          %v289 = vadd.s32 %v285, %v287
          %v290 = vadd.s32 %v286, %v288
          %v293 = vrot.slane %v279, 7
          %v294 = vrot.slane %v280, 7
          %v297 = vmul.f32 %v279, %v293
          %v298 = vmul.f32 %v280, %v294
          %v299 = vmul.f32 %v297, %v283
          %v300 = vmul.f32 %v298, %v284
          %v301 = vrot.slane %v271, 7
          %v302 = vrot.slane %v272, 7
          %v303 = vadd.s32 %v285, %v301
          %v304 = vadd.s32 %v286, %v302
          %v307 = vrot.slane %v277, 7
          %v308 = vrot.slane %v278, 7
          %v311 = vmul.f32 %v279, %v307
          %v312 = vmul.f32 %v280, %v308
          %v313 = vmul.f32 %v311, %v283
          %v314 = vmul.f32 %v312, %v284
          %v315 = vmul.u32 %v271, 16
          %v316 = vmul.u32 %v272, 16
          %v317 = vadd.s32 %v315, %v287
          %v318 = vadd.s32 %v316, %v288
          %v319 = vmul.f32 %v277, %v293
          %v320 = vmul.f32 %v278, %v294
          %v321 = vmul.f32 %v319, %v283
          %v322 = vmul.f32 %v320, %v284
          %v323 = vadd.s32 %v315, %v301
          %v324 = vadd.s32 %v316, %v302
          %v325 = vmul.f32 %v277, %v307
          %v326 = vmul.f32 %v278, %v308
          %v327 = vmul.f32 %v325, %v283
          %v328 = vmul.f32 %v326, %v284
          %v329 = vlaneseq
          %v330 = vshrl.u32 %v329, 7
          %v331 = vadd.s32 %v330, 8
          %v332 = vadd.s32 %v330, 16
          %v333 = vadd.s32 %v330, 24
          %v334 = vadd.s32 %v330, 32
          %v335 = vadd.s32 %v330, 40
          %v336 = vadd.s32 %v330, 48
          %v337 = vadd.s32 %v330, 56
          %v338 = vadd.s32 %v330, 64
          %v339 = vadd.s32 %v330, 72
          %v340 = vadd.s32 %v330, 80
          %v341 = vadd.s32 %v330, 88
          %v342 = vadd.s32 %v330, 96
          %v343 = vadd.s32 %v330, 104
          %v344 = vadd.s32 %v330, 112
          %v345 = vadd.s32 %v330, 120
          %v346 = vadd.s32 %v330, 128
          %v347 = vadd.s32 %v330, 136
          %v348 = vadd.s32 %v330, 144
          %v349 = vadd.s32 %v330, 152
          %v350 = vadd.s32 %v330, 160
          %v351 = vadd.s32 %v330, 168
          %v352 = vadd.s32 %v330, 176
          %v353 = vadd.s32 %v330, 184
          %v354 = vadd.s32 %v330, 192
          %v355 = vadd.s32 %v330, 200
          %v356 = vadd.s32 %v330, 208
          %v357 = vadd.s32 %v330, 216
          %v358 = vadd.s32 %v330, 224
          %v359 = vadd.s32 %v330, 232
          %v360 = vadd.s32 %v330, 240
          %v361 = vadd.s32 %v330, 248
          %v362 = vlaneseq
          %v363 = vshrl.u32 %v362, 7
          %v364 = vsub.s32 1, %v363
          %v365 = vrot.slane %v289, %v364
          %v366 = vlaneseq
          %v367 = vshrl.u32 %v366, 7
          %v368 = vsub.s32 1, %v367
          %v369 = vrot.slane %v290, %v368
          %vm370 = vcmp.eq.s32.totalorder %v330, %v365
          %vm371 = vcmp.eq.s32.totalorder %v330, %v369
          %vm372 = vcmp.eq.s32.totalorder %v331, %v365
          %vm373 = vcmp.eq.s32.totalorder %v331, %v369
          %vm374 = vcmp.eq.s32.totalorder %v332, %v365
          %vm375 = vcmp.eq.s32.totalorder %v332, %v369
          %vm376 = vcmp.eq.s32.totalorder %v333, %v365
          %vm377 = vcmp.eq.s32.totalorder %v333, %v369
          %vm378 = vcmp.eq.s32.totalorder %v334, %v365
          %vm379 = vcmp.eq.s32.totalorder %v334, %v369
          %vm380 = vcmp.eq.s32.totalorder %v335, %v365
          %vm381 = vcmp.eq.s32.totalorder %v335, %v369
          %vm382 = vcmp.eq.s32.totalorder %v336, %v365
          %vm383 = vcmp.eq.s32.totalorder %v336, %v369
          %vm384 = vcmp.eq.s32.totalorder %v337, %v365
          %vm385 = vcmp.eq.s32.totalorder %v337, %v369
          %vm386 = vcmp.eq.s32.totalorder %v338, %v365
          %vm387 = vcmp.eq.s32.totalorder %v338, %v369
          %vm388 = vcmp.eq.s32.totalorder %v339, %v365
          %vm389 = vcmp.eq.s32.totalorder %v339, %v369
          %vm390 = vcmp.eq.s32.totalorder %v340, %v365
          %vm391 = vcmp.eq.s32.totalorder %v340, %v369
          %vm392 = vcmp.eq.s32.totalorder %v341, %v365
          %vm393 = vcmp.eq.s32.totalorder %v341, %v369
          %vm394 = vcmp.eq.s32.totalorder %v342, %v365
          %vm395 = vcmp.eq.s32.totalorder %v342, %v369
          %vm396 = vcmp.eq.s32.totalorder %v343, %v365
          %vm397 = vcmp.eq.s32.totalorder %v343, %v369
          %vm398 = vcmp.eq.s32.totalorder %v344, %v365
          %vm399 = vcmp.eq.s32.totalorder %v344, %v369
          %vm400 = vcmp.eq.s32.totalorder %v345, %v365
          %vm401 = vcmp.eq.s32.totalorder %v345, %v369
          %vm402 = vcmp.eq.s32.totalorder %v346, %v365
          %vm403 = vcmp.eq.s32.totalorder %v346, %v369
          %vm404 = vcmp.eq.s32.totalorder %v347, %v365
          %vm405 = vcmp.eq.s32.totalorder %v347, %v369
          %vm406 = vcmp.eq.s32.totalorder %v348, %v365
          %vm407 = vcmp.eq.s32.totalorder %v348, %v369
          %vm408 = vcmp.eq.s32.totalorder %v349, %v365
          %vm409 = vcmp.eq.s32.totalorder %v349, %v369
          %vm410 = vcmp.eq.s32.totalorder %v350, %v365
          %vm411 = vcmp.eq.s32.totalorder %v350, %v369
          %vm412 = vcmp.eq.s32.totalorder %v351, %v365
          %vm413 = vcmp.eq.s32.totalorder %v351, %v369
          %vm414 = vcmp.eq.s32.totalorder %v352, %v365
          %vm415 = vcmp.eq.s32.totalorder %v352, %v369
          %vm416 = vcmp.eq.s32.totalorder %v353, %v365
          %vm417 = vcmp.eq.s32.totalorder %v353, %v369
          %vm418 = vcmp.eq.s32.totalorder %v354, %v365
          %vm419 = vcmp.eq.s32.totalorder %v354, %v369
          %vm420 = vcmp.eq.s32.totalorder %v355, %v365
          %vm421 = vcmp.eq.s32.totalorder %v355, %v369
          %vm422 = vcmp.eq.s32.totalorder %v356, %v365
          %vm423 = vcmp.eq.s32.totalorder %v356, %v369
          %vm424 = vcmp.eq.s32.totalorder %v357, %v365
          %vm425 = vcmp.eq.s32.totalorder %v357, %v369
          %vm426 = vcmp.eq.s32.totalorder %v358, %v365
          %vm427 = vcmp.eq.s32.totalorder %v358, %v369
          %vm428 = vcmp.eq.s32.totalorder %v359, %v365
          %vm429 = vcmp.eq.s32.totalorder %v359, %v369
          %vm430 = vcmp.eq.s32.totalorder %v360, %v365
          %vm431 = vcmp.eq.s32.totalorder %v360, %v369
          %vm432 = vcmp.eq.s32.totalorder %v361, %v365
          %vm433 = vcmp.eq.s32.totalorder %v361, %v369
          %v434 = vlaneseq
          %v435 = vshrl.u32 %v434, 7
          %v436 = vsub.s32 1, %v435
          %v437 = vrot.slane %v299, %v436
          %v438 = vlaneseq
          %v439 = vshrl.u32 %v438, 7
          %v440 = vsub.s32 1, %v439
          %v441 = vrot.slane %v300, %v440
          %v442 = vsel %vm370, %v437, 0.0
          %v443 = vsel %vm371, %v441, 0.0
          %v444 = vsel %vm372, %v437, 0.0
          %v445 = vsel %vm373, %v441, 0.0
          %v446 = vsel %vm374, %v437, 0.0
          %v447 = vsel %vm375, %v441, 0.0
          %v448 = vsel %vm376, %v437, 0.0
          %v449 = vsel %vm377, %v441, 0.0
          %v450 = vsel %vm378, %v437, 0.0
          %v451 = vsel %vm379, %v441, 0.0
          %v452 = vsel %vm380, %v437, 0.0
          %v453 = vsel %vm381, %v441, 0.0
          %v454 = vsel %vm382, %v437, 0.0
          %v455 = vsel %vm383, %v441, 0.0
          %v456 = vsel %vm384, %v437, 0.0
          %v457 = vsel %vm385, %v441, 0.0
          %v458 = vsel %vm386, %v437, 0.0
          %v459 = vsel %vm387, %v441, 0.0
          %v460 = vsel %vm388, %v437, 0.0
          %v461 = vsel %vm389, %v441, 0.0
          %v462 = vsel %vm390, %v437, 0.0
          %v463 = vsel %vm391, %v441, 0.0
          %v464 = vsel %vm392, %v437, 0.0
          %v465 = vsel %vm393, %v441, 0.0
          %v466 = vsel %vm394, %v437, 0.0
          %v467 = vsel %vm395, %v441, 0.0
          %v468 = vsel %vm396, %v437, 0.0
          %v469 = vsel %vm397, %v441, 0.0
          %v470 = vsel %vm398, %v437, 0.0
          %v471 = vsel %vm399, %v441, 0.0
          %v472 = vsel %vm400, %v437, 0.0
          %v473 = vsel %vm401, %v441, 0.0
          %v474 = vsel %vm402, %v437, 0.0
          %v475 = vsel %vm403, %v441, 0.0
          %v476 = vsel %vm404, %v437, 0.0
          %v477 = vsel %vm405, %v441, 0.0
          %v478 = vsel %vm406, %v437, 0.0
          %v479 = vsel %vm407, %v441, 0.0
          %v480 = vsel %vm408, %v437, 0.0
          %v481 = vsel %vm409, %v441, 0.0
          %v482 = vsel %vm410, %v437, 0.0
          %v483 = vsel %vm411, %v441, 0.0
          %v484 = vsel %vm412, %v437, 0.0
          %v485 = vsel %vm413, %v441, 0.0
          %v486 = vsel %vm414, %v437, 0.0
          %v487 = vsel %vm415, %v441, 0.0
          %v488 = vsel %vm416, %v437, 0.0
          %v489 = vsel %vm417, %v441, 0.0
          %v490 = vsel %vm418, %v437, 0.0
          %v491 = vsel %vm419, %v441, 0.0
          %v492 = vsel %vm420, %v437, 0.0
          %v493 = vsel %vm421, %v441, 0.0
          %v494 = vsel %vm422, %v437, 0.0
          %v495 = vsel %vm423, %v441, 0.0
          %v496 = vsel %vm424, %v437, 0.0
          %v497 = vsel %vm425, %v441, 0.0
          %v498 = vsel %vm426, %v437, 0.0
          %v499 = vsel %vm427, %v441, 0.0
          %v500 = vsel %vm428, %v437, 0.0
          %v501 = vsel %vm429, %v441, 0.0
          %v502 = vsel %vm430, %v437, 0.0
          %v503 = vsel %vm431, %v441, 0.0
          %v504 = vsel %vm432, %v437, 0.0
          %v505 = vsel %vm433, %v441, 0.0
          %v506 = vadd.f32 %v442, 0.0
          %v507 = vadd.f32 %v443, 0.0
          %v508 = vadd.f32 %v444, 0.0
          %v509 = vadd.f32 %v445, 0.0
          %v510 = vadd.f32 %v446, 0.0
          %v511 = vadd.f32 %v447, 0.0
          %v512 = vadd.f32 %v448, 0.0
          %v513 = vadd.f32 %v449, 0.0
          %v514 = vadd.f32 %v450, 0.0
          %v515 = vadd.f32 %v451, 0.0
          %v516 = vadd.f32 %v452, 0.0
          %v517 = vadd.f32 %v453, 0.0
          %v518 = vadd.f32 %v454, 0.0
          %v519 = vadd.f32 %v455, 0.0
          %v520 = vadd.f32 %v456, 0.0
          %v521 = vadd.f32 %v457, 0.0
          %v522 = vadd.f32 %v458, 0.0
          %v523 = vadd.f32 %v459, 0.0
          %v524 = vadd.f32 %v460, 0.0
          %v525 = vadd.f32 %v461, 0.0
          %v526 = vadd.f32 %v462, 0.0
          %v527 = vadd.f32 %v463, 0.0
          %v528 = vadd.f32 %v464, 0.0
          %v529 = vadd.f32 %v465, 0.0
          %v530 = vadd.f32 %v466, 0.0
          %v531 = vadd.f32 %v467, 0.0
          %v532 = vadd.f32 %v468, 0.0
          %v533 = vadd.f32 %v469, 0.0
          %v534 = vadd.f32 %v470, 0.0
          %v535 = vadd.f32 %v471, 0.0
          %v536 = vadd.f32 %v472, 0.0
          %v537 = vadd.f32 %v473, 0.0
          %v538 = vadd.f32 %v474, 0.0
          %v539 = vadd.f32 %v475, 0.0
          %v540 = vadd.f32 %v476, 0.0
          %v541 = vadd.f32 %v477, 0.0
          %v542 = vadd.f32 %v478, 0.0
          %v543 = vadd.f32 %v479, 0.0
          %v544 = vadd.f32 %v480, 0.0
          %v545 = vadd.f32 %v481, 0.0
          %v546 = vadd.f32 %v482, 0.0
          %v547 = vadd.f32 %v483, 0.0
          %v548 = vadd.f32 %v484, 0.0
          %v549 = vadd.f32 %v485, 0.0
          %v550 = vadd.f32 %v486, 0.0
          %v551 = vadd.f32 %v487, 0.0
          %v552 = vadd.f32 %v488, 0.0
          %v553 = vadd.f32 %v489, 0.0
          %v554 = vadd.f32 %v490, 0.0
          %v555 = vadd.f32 %v491, 0.0
          %v556 = vadd.f32 %v492, 0.0
          %v557 = vadd.f32 %v493, 0.0
          %v558 = vadd.f32 %v494, 0.0
          %v559 = vadd.f32 %v495, 0.0
          %v560 = vadd.f32 %v496, 0.0
          %v561 = vadd.f32 %v497, 0.0
          %v562 = vadd.f32 %v498, 0.0
          %v563 = vadd.f32 %v499, 0.0
          %v564 = vadd.f32 %v500, 0.0
          %v565 = vadd.f32 %v501, 0.0
          %v566 = vadd.f32 %v502, 0.0
          %v567 = vadd.f32 %v503, 0.0
          %v568 = vadd.f32 %v504, 0.0
          %v569 = vadd.f32 %v505, 0.0
          %v570 = vlaneseq
          %v571 = vshrl.u32 %v570, 7
          %v572 = vsub.s32 1, %v571
          %v573 = vrot.slane %v303, %v572
          %v574 = vlaneseq
          %v575 = vshrl.u32 %v574, 7
          %v576 = vsub.s32 1, %v575
          %v577 = vrot.slane %v304, %v576
          %vm578 = vcmp.eq.s32.totalorder %v330, %v573
          %vm579 = vcmp.eq.s32.totalorder %v330, %v577
          %vm580 = vcmp.eq.s32.totalorder %v331, %v573
          %vm581 = vcmp.eq.s32.totalorder %v331, %v577
          %vm582 = vcmp.eq.s32.totalorder %v332, %v573
          %vm583 = vcmp.eq.s32.totalorder %v332, %v577
          %vm584 = vcmp.eq.s32.totalorder %v333, %v573
          %vm585 = vcmp.eq.s32.totalorder %v333, %v577
          %vm586 = vcmp.eq.s32.totalorder %v334, %v573
          %vm587 = vcmp.eq.s32.totalorder %v334, %v577
          %vm588 = vcmp.eq.s32.totalorder %v335, %v573
          %vm589 = vcmp.eq.s32.totalorder %v335, %v577
          %vm590 = vcmp.eq.s32.totalorder %v336, %v573
          %vm591 = vcmp.eq.s32.totalorder %v336, %v577
          %vm592 = vcmp.eq.s32.totalorder %v337, %v573
          %vm593 = vcmp.eq.s32.totalorder %v337, %v577
          %vm594 = vcmp.eq.s32.totalorder %v338, %v573
          %vm595 = vcmp.eq.s32.totalorder %v338, %v577
          %vm596 = vcmp.eq.s32.totalorder %v339, %v573
          %vm597 = vcmp.eq.s32.totalorder %v339, %v577
          %vm598 = vcmp.eq.s32.totalorder %v340, %v573
          %vm599 = vcmp.eq.s32.totalorder %v340, %v577
          %vm600 = vcmp.eq.s32.totalorder %v341, %v573
          %vm601 = vcmp.eq.s32.totalorder %v341, %v577
          %vm602 = vcmp.eq.s32.totalorder %v342, %v573
          %vm603 = vcmp.eq.s32.totalorder %v342, %v577
          %vm604 = vcmp.eq.s32.totalorder %v343, %v573
          %vm605 = vcmp.eq.s32.totalorder %v343, %v577
          %vm606 = vcmp.eq.s32.totalorder %v344, %v573
          %vm607 = vcmp.eq.s32.totalorder %v344, %v577
          %vm608 = vcmp.eq.s32.totalorder %v345, %v573
          %vm609 = vcmp.eq.s32.totalorder %v345, %v577
          %vm610 = vcmp.eq.s32.totalorder %v346, %v573
          %vm611 = vcmp.eq.s32.totalorder %v346, %v577
          %vm612 = vcmp.eq.s32.totalorder %v347, %v573
          %vm613 = vcmp.eq.s32.totalorder %v347, %v577
          %vm614 = vcmp.eq.s32.totalorder %v348, %v573
          %vm615 = vcmp.eq.s32.totalorder %v348, %v577
          %vm616 = vcmp.eq.s32.totalorder %v349, %v573
          %vm617 = vcmp.eq.s32.totalorder %v349, %v577
          %vm618 = vcmp.eq.s32.totalorder %v350, %v573
          %vm619 = vcmp.eq.s32.totalorder %v350, %v577
          %vm620 = vcmp.eq.s32.totalorder %v351, %v573
          %vm621 = vcmp.eq.s32.totalorder %v351, %v577
          %vm622 = vcmp.eq.s32.totalorder %v352, %v573
          %vm623 = vcmp.eq.s32.totalorder %v352, %v577
          %vm624 = vcmp.eq.s32.totalorder %v353, %v573
          %vm625 = vcmp.eq.s32.totalorder %v353, %v577
          %vm626 = vcmp.eq.s32.totalorder %v354, %v573
          %vm627 = vcmp.eq.s32.totalorder %v354, %v577
          %vm628 = vcmp.eq.s32.totalorder %v355, %v573
          %vm629 = vcmp.eq.s32.totalorder %v355, %v577
          %vm630 = vcmp.eq.s32.totalorder %v356, %v573
          %vm631 = vcmp.eq.s32.totalorder %v356, %v577
          %vm632 = vcmp.eq.s32.totalorder %v357, %v573
          %vm633 = vcmp.eq.s32.totalorder %v357, %v577
          %vm634 = vcmp.eq.s32.totalorder %v358, %v573
          %vm635 = vcmp.eq.s32.totalorder %v358, %v577
          %vm636 = vcmp.eq.s32.totalorder %v359, %v573
          %vm637 = vcmp.eq.s32.totalorder %v359, %v577
          %vm638 = vcmp.eq.s32.totalorder %v360, %v573
          %vm639 = vcmp.eq.s32.totalorder %v360, %v577
          %vm640 = vcmp.eq.s32.totalorder %v361, %v573
          %vm641 = vcmp.eq.s32.totalorder %v361, %v577
          %v642 = vlaneseq
          %v643 = vshrl.u32 %v642, 7
          %v644 = vsub.s32 1, %v643
          %v645 = vrot.slane %v313, %v644
          %v646 = vlaneseq
          %v647 = vshrl.u32 %v646, 7
          %v648 = vsub.s32 1, %v647
          %v649 = vrot.slane %v314, %v648
          %v650 = vsel %vm578, %v645, 0.0
          %v651 = vsel %vm579, %v649, 0.0
          %v652 = vsel %vm580, %v645, 0.0
          %v653 = vsel %vm581, %v649, 0.0
          %v654 = vsel %vm582, %v645, 0.0
          %v655 = vsel %vm583, %v649, 0.0
          %v656 = vsel %vm584, %v645, 0.0
          %v657 = vsel %vm585, %v649, 0.0
          %v658 = vsel %vm586, %v645, 0.0
          %v659 = vsel %vm587, %v649, 0.0
          %v660 = vsel %vm588, %v645, 0.0
          %v661 = vsel %vm589, %v649, 0.0
          %v662 = vsel %vm590, %v645, 0.0
          %v663 = vsel %vm591, %v649, 0.0
          %v664 = vsel %vm592, %v645, 0.0
          %v665 = vsel %vm593, %v649, 0.0
          %v666 = vsel %vm594, %v645, 0.0
          %v667 = vsel %vm595, %v649, 0.0
          %v668 = vsel %vm596, %v645, 0.0
          %v669 = vsel %vm597, %v649, 0.0
          %v670 = vsel %vm598, %v645, 0.0
          %v671 = vsel %vm599, %v649, 0.0
          %v672 = vsel %vm600, %v645, 0.0
          %v673 = vsel %vm601, %v649, 0.0
          %v674 = vsel %vm602, %v645, 0.0
          %v675 = vsel %vm603, %v649, 0.0
          %v676 = vsel %vm604, %v645, 0.0
          %v677 = vsel %vm605, %v649, 0.0
          %v678 = vsel %vm606, %v645, 0.0
          %v679 = vsel %vm607, %v649, 0.0
          %v680 = vsel %vm608, %v645, 0.0
          %v681 = vsel %vm609, %v649, 0.0
          %v682 = vsel %vm610, %v645, 0.0
          %v683 = vsel %vm611, %v649, 0.0
          %v684 = vsel %vm612, %v645, 0.0
          %v685 = vsel %vm613, %v649, 0.0
          %v686 = vsel %vm614, %v645, 0.0
          %v687 = vsel %vm615, %v649, 0.0
          %v688 = vsel %vm616, %v645, 0.0
          %v689 = vsel %vm617, %v649, 0.0
          %v690 = vsel %vm618, %v645, 0.0
          %v691 = vsel %vm619, %v649, 0.0
          %v692 = vsel %vm620, %v645, 0.0
          %v693 = vsel %vm621, %v649, 0.0
          %v694 = vsel %vm622, %v645, 0.0
          %v695 = vsel %vm623, %v649, 0.0
          %v696 = vsel %vm624, %v645, 0.0
          %v697 = vsel %vm625, %v649, 0.0
          %v698 = vsel %vm626, %v645, 0.0
          %v699 = vsel %vm627, %v649, 0.0
          %v700 = vsel %vm628, %v645, 0.0
          %v701 = vsel %vm629, %v649, 0.0
          %v702 = vsel %vm630, %v645, 0.0
          %v703 = vsel %vm631, %v649, 0.0
          %v704 = vsel %vm632, %v645, 0.0
          %v705 = vsel %vm633, %v649, 0.0
          %v706 = vsel %vm634, %v645, 0.0
          %v707 = vsel %vm635, %v649, 0.0
          %v708 = vsel %vm636, %v645, 0.0
          %v709 = vsel %vm637, %v649, 0.0
          %v710 = vsel %vm638, %v645, 0.0
          %v711 = vsel %vm639, %v649, 0.0
          %v712 = vsel %vm640, %v645, 0.0
          %v713 = vsel %vm641, %v649, 0.0
          %v714 = vadd.f32 %v506, %v650
          %v715 = vadd.f32 %v507, %v651
          %v716 = vadd.f32 %v508, %v652
          %v717 = vadd.f32 %v509, %v653
          %v718 = vadd.f32 %v510, %v654
          %v719 = vadd.f32 %v511, %v655
          %v720 = vadd.f32 %v512, %v656
          %v721 = vadd.f32 %v513, %v657
          %v722 = vadd.f32 %v514, %v658
          %v723 = vadd.f32 %v515, %v659
          %v724 = vadd.f32 %v516, %v660
          %v725 = vadd.f32 %v517, %v661
          %v726 = vadd.f32 %v518, %v662
          %v727 = vadd.f32 %v519, %v663
          %v728 = vadd.f32 %v520, %v664
          %v729 = vadd.f32 %v521, %v665
          %v730 = vadd.f32 %v522, %v666
          %v731 = vadd.f32 %v523, %v667
          %v732 = vadd.f32 %v524, %v668
          %v733 = vadd.f32 %v525, %v669
          %v734 = vadd.f32 %v526, %v670
          %v735 = vadd.f32 %v527, %v671
          %v736 = vadd.f32 %v528, %v672
          %v737 = vadd.f32 %v529, %v673
          %v738 = vadd.f32 %v530, %v674
          %v739 = vadd.f32 %v531, %v675
          %v740 = vadd.f32 %v532, %v676
          %v741 = vadd.f32 %v533, %v677
          %v742 = vadd.f32 %v534, %v678
          %v743 = vadd.f32 %v535, %v679
          %v744 = vadd.f32 %v536, %v680
          %v745 = vadd.f32 %v537, %v681
          %v746 = vadd.f32 %v538, %v682
          %v747 = vadd.f32 %v539, %v683
          %v748 = vadd.f32 %v540, %v684
          %v749 = vadd.f32 %v541, %v685
          %v750 = vadd.f32 %v542, %v686
          %v751 = vadd.f32 %v543, %v687
          %v752 = vadd.f32 %v544, %v688
          %v753 = vadd.f32 %v545, %v689
          %v754 = vadd.f32 %v546, %v690
          %v755 = vadd.f32 %v547, %v691
          %v756 = vadd.f32 %v548, %v692
          %v757 = vadd.f32 %v549, %v693
          %v758 = vadd.f32 %v550, %v694
          %v759 = vadd.f32 %v551, %v695
          %v760 = vadd.f32 %v552, %v696
          %v761 = vadd.f32 %v553, %v697
          %v762 = vadd.f32 %v554, %v698
          %v763 = vadd.f32 %v555, %v699
          %v764 = vadd.f32 %v556, %v700
          %v765 = vadd.f32 %v557, %v701
          %v766 = vadd.f32 %v558, %v702
          %v767 = vadd.f32 %v559, %v703
          %v768 = vadd.f32 %v560, %v704
          %v769 = vadd.f32 %v561, %v705
          %v770 = vadd.f32 %v562, %v706
          %v771 = vadd.f32 %v563, %v707
          %v772 = vadd.f32 %v564, %v708
          %v773 = vadd.f32 %v565, %v709
          %v774 = vadd.f32 %v566, %v710
          %v775 = vadd.f32 %v567, %v711
          %v776 = vadd.f32 %v568, %v712
          %v777 = vadd.f32 %v569, %v713
          %v778 = vlaneseq
          %v779 = vshrl.u32 %v778, 7
          %v780 = vsub.s32 1, %v779
          %v781 = vrot.slane %v317, %v780
          %v782 = vlaneseq
          %v783 = vshrl.u32 %v782, 7
          %v784 = vsub.s32 1, %v783
          %v785 = vrot.slane %v318, %v784
          %vm786 = vcmp.eq.s32.totalorder %v330, %v781
          %vm787 = vcmp.eq.s32.totalorder %v330, %v785
          %vm788 = vcmp.eq.s32.totalorder %v331, %v781
          %vm789 = vcmp.eq.s32.totalorder %v331, %v785
          %vm790 = vcmp.eq.s32.totalorder %v332, %v781
          %vm791 = vcmp.eq.s32.totalorder %v332, %v785
          %vm792 = vcmp.eq.s32.totalorder %v333, %v781
          %vm793 = vcmp.eq.s32.totalorder %v333, %v785
          %vm794 = vcmp.eq.s32.totalorder %v334, %v781
          %vm795 = vcmp.eq.s32.totalorder %v334, %v785
          %vm796 = vcmp.eq.s32.totalorder %v335, %v781
          %vm797 = vcmp.eq.s32.totalorder %v335, %v785
          %vm798 = vcmp.eq.s32.totalorder %v336, %v781
          %vm799 = vcmp.eq.s32.totalorder %v336, %v785
          %vm800 = vcmp.eq.s32.totalorder %v337, %v781
          %vm801 = vcmp.eq.s32.totalorder %v337, %v785
          %vm802 = vcmp.eq.s32.totalorder %v338, %v781
          %vm803 = vcmp.eq.s32.totalorder %v338, %v785
          %vm804 = vcmp.eq.s32.totalorder %v339, %v781
          %vm805 = vcmp.eq.s32.totalorder %v339, %v785
          %vm806 = vcmp.eq.s32.totalorder %v340, %v781
          %vm807 = vcmp.eq.s32.totalorder %v340, %v785
          %vm808 = vcmp.eq.s32.totalorder %v341, %v781
          %vm809 = vcmp.eq.s32.totalorder %v341, %v785
          %vm810 = vcmp.eq.s32.totalorder %v342, %v781
          %vm811 = vcmp.eq.s32.totalorder %v342, %v785
          %vm812 = vcmp.eq.s32.totalorder %v343, %v781
          %vm813 = vcmp.eq.s32.totalorder %v343, %v785
          %vm814 = vcmp.eq.s32.totalorder %v344, %v781
          %vm815 = vcmp.eq.s32.totalorder %v344, %v785
          %vm816 = vcmp.eq.s32.totalorder %v345, %v781
          %vm817 = vcmp.eq.s32.totalorder %v345, %v785
          %vm818 = vcmp.eq.s32.totalorder %v346, %v781
          %vm819 = vcmp.eq.s32.totalorder %v346, %v785
          %vm820 = vcmp.eq.s32.totalorder %v347, %v781
          %vm821 = vcmp.eq.s32.totalorder %v347, %v785
          %vm822 = vcmp.eq.s32.totalorder %v348, %v781
          %vm823 = vcmp.eq.s32.totalorder %v348, %v785
          %vm824 = vcmp.eq.s32.totalorder %v349, %v781
          %vm825 = vcmp.eq.s32.totalorder %v349, %v785
          %vm826 = vcmp.eq.s32.totalorder %v350, %v781
          %vm827 = vcmp.eq.s32.totalorder %v350, %v785
          %vm828 = vcmp.eq.s32.totalorder %v351, %v781
          %vm829 = vcmp.eq.s32.totalorder %v351, %v785
          %vm830 = vcmp.eq.s32.totalorder %v352, %v781
          %vm831 = vcmp.eq.s32.totalorder %v352, %v785
          %vm832 = vcmp.eq.s32.totalorder %v353, %v781
          %vm833 = vcmp.eq.s32.totalorder %v353, %v785
          %vm834 = vcmp.eq.s32.totalorder %v354, %v781
          %vm835 = vcmp.eq.s32.totalorder %v354, %v785
          %vm836 = vcmp.eq.s32.totalorder %v355, %v781
          %vm837 = vcmp.eq.s32.totalorder %v355, %v785
          %vm838 = vcmp.eq.s32.totalorder %v356, %v781
          %vm839 = vcmp.eq.s32.totalorder %v356, %v785
          %vm840 = vcmp.eq.s32.totalorder %v357, %v781
          %vm841 = vcmp.eq.s32.totalorder %v357, %v785
          %vm842 = vcmp.eq.s32.totalorder %v358, %v781
          %vm843 = vcmp.eq.s32.totalorder %v358, %v785
          %vm844 = vcmp.eq.s32.totalorder %v359, %v781
          %vm845 = vcmp.eq.s32.totalorder %v359, %v785
          %vm846 = vcmp.eq.s32.totalorder %v360, %v781
          %vm847 = vcmp.eq.s32.totalorder %v360, %v785
          %vm848 = vcmp.eq.s32.totalorder %v361, %v781
          %vm849 = vcmp.eq.s32.totalorder %v361, %v785
          %v850 = vlaneseq
          %v851 = vshrl.u32 %v850, 7
          %v852 = vsub.s32 1, %v851
          %v853 = vrot.slane %v321, %v852
          %v854 = vlaneseq
          %v855 = vshrl.u32 %v854, 7
          %v856 = vsub.s32 1, %v855
          %v857 = vrot.slane %v322, %v856
          %v858 = vsel %vm786, %v853, 0.0
          %v859 = vsel %vm787, %v857, 0.0
          %v860 = vsel %vm788, %v853, 0.0
          %v861 = vsel %vm789, %v857, 0.0
          %v862 = vsel %vm790, %v853, 0.0
          %v863 = vsel %vm791, %v857, 0.0
          %v864 = vsel %vm792, %v853, 0.0
          %v865 = vsel %vm793, %v857, 0.0
          %v866 = vsel %vm794, %v853, 0.0
          %v867 = vsel %vm795, %v857, 0.0
          %v868 = vsel %vm796, %v853, 0.0
          %v869 = vsel %vm797, %v857, 0.0
          %v870 = vsel %vm798, %v853, 0.0
          %v871 = vsel %vm799, %v857, 0.0
          %v872 = vsel %vm800, %v853, 0.0
          %v873 = vsel %vm801, %v857, 0.0
          %v874 = vsel %vm802, %v853, 0.0
          %v875 = vsel %vm803, %v857, 0.0
          %v876 = vsel %vm804, %v853, 0.0
          %v877 = vsel %vm805, %v857, 0.0
          %v878 = vsel %vm806, %v853, 0.0
          %v879 = vsel %vm807, %v857, 0.0
          %v880 = vsel %vm808, %v853, 0.0
          %v881 = vsel %vm809, %v857, 0.0
          %v882 = vsel %vm810, %v853, 0.0
          %v883 = vsel %vm811, %v857, 0.0
          %v884 = vsel %vm812, %v853, 0.0
          %v885 = vsel %vm813, %v857, 0.0
          %v886 = vsel %vm814, %v853, 0.0
          %v887 = vsel %vm815, %v857, 0.0
          %v888 = vsel %vm816, %v853, 0.0
          %v889 = vsel %vm817, %v857, 0.0
          %v890 = vsel %vm818, %v853, 0.0
          %v891 = vsel %vm819, %v857, 0.0
          %v892 = vsel %vm820, %v853, 0.0
          %v893 = vsel %vm821, %v857, 0.0
          %v894 = vsel %vm822, %v853, 0.0
          %v895 = vsel %vm823, %v857, 0.0
          %v896 = vsel %vm824, %v853, 0.0
          %v897 = vsel %vm825, %v857, 0.0
          %v898 = vsel %vm826, %v853, 0.0
          %v899 = vsel %vm827, %v857, 0.0
          %v900 = vsel %vm828, %v853, 0.0
          %v901 = vsel %vm829, %v857, 0.0
          %v902 = vsel %vm830, %v853, 0.0
          %v903 = vsel %vm831, %v857, 0.0
          %v904 = vsel %vm832, %v853, 0.0
          %v905 = vsel %vm833, %v857, 0.0
          %v906 = vsel %vm834, %v853, 0.0
          %v907 = vsel %vm835, %v857, 0.0
          %v908 = vsel %vm836, %v853, 0.0
          %v909 = vsel %vm837, %v857, 0.0
          %v910 = vsel %vm838, %v853, 0.0
          %v911 = vsel %vm839, %v857, 0.0
          %v912 = vsel %vm840, %v853, 0.0
          %v913 = vsel %vm841, %v857, 0.0
          %v914 = vsel %vm842, %v853, 0.0
          %v915 = vsel %vm843, %v857, 0.0
          %v916 = vsel %vm844, %v853, 0.0
          %v917 = vsel %vm845, %v857, 0.0
          %v918 = vsel %vm846, %v853, 0.0
          %v919 = vsel %vm847, %v857, 0.0
          %v920 = vsel %vm848, %v853, 0.0
          %v921 = vsel %vm849, %v857, 0.0
          %v922 = vadd.f32 %v714, %v858
          %v923 = vadd.f32 %v715, %v859
          %v924 = vadd.f32 %v716, %v860
          %v925 = vadd.f32 %v717, %v861
          %v926 = vadd.f32 %v718, %v862
          %v927 = vadd.f32 %v719, %v863
          %v928 = vadd.f32 %v720, %v864
          %v929 = vadd.f32 %v721, %v865
          %v930 = vadd.f32 %v722, %v866
          %v931 = vadd.f32 %v723, %v867
          %v932 = vadd.f32 %v724, %v868
          %v933 = vadd.f32 %v725, %v869
          %v934 = vadd.f32 %v726, %v870
          %v935 = vadd.f32 %v727, %v871
          %v936 = vadd.f32 %v728, %v872
          %v937 = vadd.f32 %v729, %v873
          %v938 = vadd.f32 %v730, %v874
          %v939 = vadd.f32 %v731, %v875
          %v940 = vadd.f32 %v732, %v876
          %v941 = vadd.f32 %v733, %v877
          %v942 = vadd.f32 %v734, %v878
          %v943 = vadd.f32 %v735, %v879
          %v944 = vadd.f32 %v736, %v880
          %v945 = vadd.f32 %v737, %v881
          %v946 = vadd.f32 %v738, %v882
          %v947 = vadd.f32 %v739, %v883
          %v948 = vadd.f32 %v740, %v884
          %v949 = vadd.f32 %v741, %v885
          %v950 = vadd.f32 %v742, %v886
          %v951 = vadd.f32 %v743, %v887
          %v952 = vadd.f32 %v744, %v888
          %v953 = vadd.f32 %v745, %v889
          %v954 = vadd.f32 %v746, %v890
          %v955 = vadd.f32 %v747, %v891
          %v956 = vadd.f32 %v748, %v892
          %v957 = vadd.f32 %v749, %v893
          %v958 = vadd.f32 %v750, %v894
          %v959 = vadd.f32 %v751, %v895
          %v960 = vadd.f32 %v752, %v896
          %v961 = vadd.f32 %v753, %v897
          %v962 = vadd.f32 %v754, %v898
          %v963 = vadd.f32 %v755, %v899
          %v964 = vadd.f32 %v756, %v900
          %v965 = vadd.f32 %v757, %v901
          %v966 = vadd.f32 %v758, %v902
          %v967 = vadd.f32 %v759, %v903
          %v968 = vadd.f32 %v760, %v904
          %v969 = vadd.f32 %v761, %v905
          %v970 = vadd.f32 %v762, %v906
          %v971 = vadd.f32 %v763, %v907
          %v972 = vadd.f32 %v764, %v908
          %v973 = vadd.f32 %v765, %v909
          %v974 = vadd.f32 %v766, %v910
          %v975 = vadd.f32 %v767, %v911
          %v976 = vadd.f32 %v768, %v912
          %v977 = vadd.f32 %v769, %v913
          %v978 = vadd.f32 %v770, %v914
          %v979 = vadd.f32 %v771, %v915
          %v980 = vadd.f32 %v772, %v916
          %v981 = vadd.f32 %v773, %v917
          %v982 = vadd.f32 %v774, %v918
          %v983 = vadd.f32 %v775, %v919
          %v984 = vadd.f32 %v776, %v920
          %v985 = vadd.f32 %v777, %v921
          %v986 = vlaneseq
          %v987 = vshrl.u32 %v986, 7
          %v988 = vsub.s32 1, %v987
          %v989 = vrot.slane %v323, %v988
          %v990 = vlaneseq
          %v991 = vshrl.u32 %v990, 7
          %v992 = vsub.s32 1, %v991
          %v993 = vrot.slane %v324, %v992
          %vm994 = vcmp.eq.s32.totalorder %v330, %v989
          %vm995 = vcmp.eq.s32.totalorder %v330, %v993
          %vm996 = vcmp.eq.s32.totalorder %v331, %v989
          %vm997 = vcmp.eq.s32.totalorder %v331, %v993
          %vm998 = vcmp.eq.s32.totalorder %v332, %v989
          %vm999 = vcmp.eq.s32.totalorder %v332, %v993
          %vm1000 = vcmp.eq.s32.totalorder %v333, %v989
          %vm1001 = vcmp.eq.s32.totalorder %v333, %v993
          %vm1002 = vcmp.eq.s32.totalorder %v334, %v989
          %vm1003 = vcmp.eq.s32.totalorder %v334, %v993
          %vm1004 = vcmp.eq.s32.totalorder %v335, %v989
          %vm1005 = vcmp.eq.s32.totalorder %v335, %v993
          %vm1006 = vcmp.eq.s32.totalorder %v336, %v989
          %vm1007 = vcmp.eq.s32.totalorder %v336, %v993
          %vm1008 = vcmp.eq.s32.totalorder %v337, %v989
          %vm1009 = vcmp.eq.s32.totalorder %v337, %v993
          %vm1010 = vcmp.eq.s32.totalorder %v338, %v989
          %vm1011 = vcmp.eq.s32.totalorder %v338, %v993
          %vm1012 = vcmp.eq.s32.totalorder %v339, %v989
          %vm1013 = vcmp.eq.s32.totalorder %v339, %v993
          %vm1014 = vcmp.eq.s32.totalorder %v340, %v989
          %vm1015 = vcmp.eq.s32.totalorder %v340, %v993
          %vm1016 = vcmp.eq.s32.totalorder %v341, %v989
          %vm1017 = vcmp.eq.s32.totalorder %v341, %v993
          %vm1018 = vcmp.eq.s32.totalorder %v342, %v989
          %vm1019 = vcmp.eq.s32.totalorder %v342, %v993
          %vm1020 = vcmp.eq.s32.totalorder %v343, %v989
          %vm1021 = vcmp.eq.s32.totalorder %v343, %v993
          %vm1022 = vcmp.eq.s32.totalorder %v344, %v989
          %vm1023 = vcmp.eq.s32.totalorder %v344, %v993
          %vm1024 = vcmp.eq.s32.totalorder %v345, %v989
          %vm1025 = vcmp.eq.s32.totalorder %v345, %v993
          %vm1026 = vcmp.eq.s32.totalorder %v346, %v989
          %vm1027 = vcmp.eq.s32.totalorder %v346, %v993
          %vm1028 = vcmp.eq.s32.totalorder %v347, %v989
          %vm1029 = vcmp.eq.s32.totalorder %v347, %v993
          %vm1030 = vcmp.eq.s32.totalorder %v348, %v989
          %vm1031 = vcmp.eq.s32.totalorder %v348, %v993
          %vm1032 = vcmp.eq.s32.totalorder %v349, %v989
          %vm1033 = vcmp.eq.s32.totalorder %v349, %v993
          %vm1034 = vcmp.eq.s32.totalorder %v350, %v989
          %vm1035 = vcmp.eq.s32.totalorder %v350, %v993
          %vm1036 = vcmp.eq.s32.totalorder %v351, %v989
          %vm1037 = vcmp.eq.s32.totalorder %v351, %v993
          %vm1038 = vcmp.eq.s32.totalorder %v352, %v989
          %vm1039 = vcmp.eq.s32.totalorder %v352, %v993
          %vm1040 = vcmp.eq.s32.totalorder %v353, %v989
          %vm1041 = vcmp.eq.s32.totalorder %v353, %v993
          %vm1042 = vcmp.eq.s32.totalorder %v354, %v989
          %vm1043 = vcmp.eq.s32.totalorder %v354, %v993
          %vm1044 = vcmp.eq.s32.totalorder %v355, %v989
          %vm1045 = vcmp.eq.s32.totalorder %v355, %v993
          %vm1046 = vcmp.eq.s32.totalorder %v356, %v989
          %vm1047 = vcmp.eq.s32.totalorder %v356, %v993
          %vm1048 = vcmp.eq.s32.totalorder %v357, %v989
          %vm1049 = vcmp.eq.s32.totalorder %v357, %v993
          %vm1050 = vcmp.eq.s32.totalorder %v358, %v989
          %vm1051 = vcmp.eq.s32.totalorder %v358, %v993
          %vm1052 = vcmp.eq.s32.totalorder %v359, %v989
          %vm1053 = vcmp.eq.s32.totalorder %v359, %v993
          %vm1054 = vcmp.eq.s32.totalorder %v360, %v989
          %vm1055 = vcmp.eq.s32.totalorder %v360, %v993
          %vm1056 = vcmp.eq.s32.totalorder %v361, %v989
          %vm1057 = vcmp.eq.s32.totalorder %v361, %v993
          %v1058 = vlaneseq
          %v1059 = vshrl.u32 %v1058, 7
          %v1060 = vsub.s32 1, %v1059
          %v1061 = vrot.slane %v327, %v1060
          %v1062 = vlaneseq
          %v1063 = vshrl.u32 %v1062, 7
          %v1064 = vsub.s32 1, %v1063
          %v1065 = vrot.slane %v328, %v1064
          %v1066 = vsel %vm994, %v1061, 0.0
          %v1067 = vsel %vm995, %v1065, 0.0
          %v1068 = vsel %vm996, %v1061, 0.0
          %v1069 = vsel %vm997, %v1065, 0.0
          %v1070 = vsel %vm998, %v1061, 0.0
          %v1071 = vsel %vm999, %v1065, 0.0
          %v1072 = vsel %vm1000, %v1061, 0.0
          %v1073 = vsel %vm1001, %v1065, 0.0
          %v1074 = vsel %vm1002, %v1061, 0.0
          %v1075 = vsel %vm1003, %v1065, 0.0
          %v1076 = vsel %vm1004, %v1061, 0.0
          %v1077 = vsel %vm1005, %v1065, 0.0
          %v1078 = vsel %vm1006, %v1061, 0.0
          %v1079 = vsel %vm1007, %v1065, 0.0
          %v1080 = vsel %vm1008, %v1061, 0.0
          %v1081 = vsel %vm1009, %v1065, 0.0
          %v1082 = vsel %vm1010, %v1061, 0.0
          %v1083 = vsel %vm1011, %v1065, 0.0
          %v1084 = vsel %vm1012, %v1061, 0.0
          %v1085 = vsel %vm1013, %v1065, 0.0
          %v1086 = vsel %vm1014, %v1061, 0.0
          %v1087 = vsel %vm1015, %v1065, 0.0
          %v1088 = vsel %vm1016, %v1061, 0.0
          %v1089 = vsel %vm1017, %v1065, 0.0
          %v1090 = vsel %vm1018, %v1061, 0.0
          %v1091 = vsel %vm1019, %v1065, 0.0
          %v1092 = vsel %vm1020, %v1061, 0.0
          %v1093 = vsel %vm1021, %v1065, 0.0
          %v1094 = vsel %vm1022, %v1061, 0.0
          %v1095 = vsel %vm1023, %v1065, 0.0
          %v1096 = vsel %vm1024, %v1061, 0.0
          %v1097 = vsel %vm1025, %v1065, 0.0
          %v1098 = vsel %vm1026, %v1061, 0.0
          %v1099 = vsel %vm1027, %v1065, 0.0
          %v1100 = vsel %vm1028, %v1061, 0.0
          %v1101 = vsel %vm1029, %v1065, 0.0
          %v1102 = vsel %vm1030, %v1061, 0.0
          %v1103 = vsel %vm1031, %v1065, 0.0
          %v1104 = vsel %vm1032, %v1061, 0.0
          %v1105 = vsel %vm1033, %v1065, 0.0
          %v1106 = vsel %vm1034, %v1061, 0.0
          %v1107 = vsel %vm1035, %v1065, 0.0
          %v1108 = vsel %vm1036, %v1061, 0.0
          %v1109 = vsel %vm1037, %v1065, 0.0
          %v1110 = vsel %vm1038, %v1061, 0.0
          %v1111 = vsel %vm1039, %v1065, 0.0
          %v1112 = vsel %vm1040, %v1061, 0.0
          %v1113 = vsel %vm1041, %v1065, 0.0
          %v1114 = vsel %vm1042, %v1061, 0.0
          %v1115 = vsel %vm1043, %v1065, 0.0
          %v1116 = vsel %vm1044, %v1061, 0.0
          %v1117 = vsel %vm1045, %v1065, 0.0
          %v1118 = vsel %vm1046, %v1061, 0.0
          %v1119 = vsel %vm1047, %v1065, 0.0
          %v1120 = vsel %vm1048, %v1061, 0.0
          %v1121 = vsel %vm1049, %v1065, 0.0
          %v1122 = vsel %vm1050, %v1061, 0.0
          %v1123 = vsel %vm1051, %v1065, 0.0
          %v1124 = vsel %vm1052, %v1061, 0.0
          %v1125 = vsel %vm1053, %v1065, 0.0
          %v1126 = vsel %vm1054, %v1061, 0.0
          %v1127 = vsel %vm1055, %v1065, 0.0
          %v1128 = vsel %vm1056, %v1061, 0.0
          %v1129 = vsel %vm1057, %v1065, 0.0
          %v1130 = vadd.f32 %v922, %v1066
          %v1131 = vadd.f32 %v923, %v1067
          %v1132 = vadd.f32 %v924, %v1068
          %v1133 = vadd.f32 %v925, %v1069
          %v1134 = vadd.f32 %v926, %v1070
          %v1135 = vadd.f32 %v927, %v1071
          %v1136 = vadd.f32 %v928, %v1072
          %v1137 = vadd.f32 %v929, %v1073
          %v1138 = vadd.f32 %v930, %v1074
          %v1139 = vadd.f32 %v931, %v1075
          %v1140 = vadd.f32 %v932, %v1076
          %v1141 = vadd.f32 %v933, %v1077
          %v1142 = vadd.f32 %v934, %v1078
          %v1143 = vadd.f32 %v935, %v1079
          %v1144 = vadd.f32 %v936, %v1080
          %v1145 = vadd.f32 %v937, %v1081
          %v1146 = vadd.f32 %v938, %v1082
          %v1147 = vadd.f32 %v939, %v1083
          %v1148 = vadd.f32 %v940, %v1084
          %v1149 = vadd.f32 %v941, %v1085
          %v1150 = vadd.f32 %v942, %v1086
          %v1151 = vadd.f32 %v943, %v1087
          %v1152 = vadd.f32 %v944, %v1088
          %v1153 = vadd.f32 %v945, %v1089
          %v1154 = vadd.f32 %v946, %v1090
          %v1155 = vadd.f32 %v947, %v1091
          %v1156 = vadd.f32 %v948, %v1092
          %v1157 = vadd.f32 %v949, %v1093
          %v1158 = vadd.f32 %v950, %v1094
          %v1159 = vadd.f32 %v951, %v1095
          %v1160 = vadd.f32 %v952, %v1096
          %v1161 = vadd.f32 %v953, %v1097
          %v1162 = vadd.f32 %v954, %v1098
          %v1163 = vadd.f32 %v955, %v1099
          %v1164 = vadd.f32 %v956, %v1100
          %v1165 = vadd.f32 %v957, %v1101
          %v1166 = vadd.f32 %v958, %v1102
          %v1167 = vadd.f32 %v959, %v1103
          %v1168 = vadd.f32 %v960, %v1104
          %v1169 = vadd.f32 %v961, %v1105
          %v1170 = vadd.f32 %v962, %v1106
          %v1171 = vadd.f32 %v963, %v1107
          %v1172 = vadd.f32 %v964, %v1108
          %v1173 = vadd.f32 %v965, %v1109
          %v1174 = vadd.f32 %v966, %v1110
          %v1175 = vadd.f32 %v967, %v1111
          %v1176 = vadd.f32 %v968, %v1112
          %v1177 = vadd.f32 %v969, %v1113
          %v1178 = vadd.f32 %v970, %v1114
          %v1179 = vadd.f32 %v971, %v1115
          %v1180 = vadd.f32 %v972, %v1116
          %v1181 = vadd.f32 %v973, %v1117
          %v1182 = vadd.f32 %v974, %v1118
          %v1183 = vadd.f32 %v975, %v1119
          %v1184 = vadd.f32 %v976, %v1120
          %v1185 = vadd.f32 %v977, %v1121
          %v1186 = vadd.f32 %v978, %v1122
          %v1187 = vadd.f32 %v979, %v1123
          %v1188 = vadd.f32 %v980, %v1124
          %v1189 = vadd.f32 %v981, %v1125
          %v1190 = vadd.f32 %v982, %v1126
          %v1191 = vadd.f32 %v983, %v1127
          %v1192 = vadd.f32 %v984, %v1128
          %v1193 = vadd.f32 %v985, %v1129
          %s1194 = smul.u32 0, 2
          %s1195 = smul.addr %s1194, 8
          %s1196 = scalar_lea.vmem [#allocation2], %s1195
          %1197 = vst [vmem:[%s1196] sm:$0xff] %v1130
          %1198 = vst [vmem:[%s1196 + $0x8] sm:$0xff] %v1131
          %1199 = vst [vmem:[%s1196 + $0x10] sm:$0xff] %v1132
          %1200 = vst [vmem:[%s1196 + $0x18] sm:$0xff] %v1133
          %1201 = vst [vmem:[%s1196 + $0x20] sm:$0xff] %v1134
          %1202 = vst [vmem:[%s1196 + $0x28] sm:$0xff] %v1135
          %1203 = vst [vmem:[%s1196 + $0x30] sm:$0xff] %v1136
          %1204 = vst [vmem:[%s1196 + $0x38] sm:$0xff] %v1137
          %1205 = vst [vmem:[%s1196 + $0x40] sm:$0xff] %v1138
          %1206 = vst [vmem:[%s1196 + $0x48] sm:$0xff] %v1139
          %1207 = vst [vmem:[%s1196 + $0x50] sm:$0xff] %v1140
          %1208 = vst [vmem:[%s1196 + $0x58] sm:$0xff] %v1141
          %1209 = vst [vmem:[%s1196 + $0x60] sm:$0xff] %v1142
          %1210 = vst [vmem:[%s1196 + $0x68] sm:$0xff] %v1143
          %1211 = vst [vmem:[%s1196 + $0x70] sm:$0xff] %v1144
          %1212 = vst [vmem:[%s1196 + $0x78] sm:$0xff] %v1145
          %1213 = vst [vmem:[%s1196 + $0x80] sm:$0xff] %v1146
          %1214 = vst [vmem:[%s1196 + $0x88] sm:$0xff] %v1147
          %1215 = vst [vmem:[%s1196 + $0x90] sm:$0xff] %v1148
          %1216 = vst [vmem:[%s1196 + $0x98] sm:$0xff] %v1149
          %1217 = vst [vmem:[%s1196 + $0xa0] sm:$0xff] %v1150
          %1218 = vst [vmem:[%s1196 + $0xa8] sm:$0xff] %v1151
          %1219 = vst [vmem:[%s1196 + $0xb0] sm:$0xff] %v1152
          %1220 = vst [vmem:[%s1196 + $0xb8] sm:$0xff] %v1153
          %1221 = vst [vmem:[%s1196 + $0xc0] sm:$0xff] %v1154
          %1222 = vst [vmem:[%s1196 + $0xc8] sm:$0xff] %v1155
          %1223 = vst [vmem:[%s1196 + $0xd0] sm:$0xff] %v1156
          %1224 = vst [vmem:[%s1196 + $0xd8] sm:$0xff] %v1157
          %1225 = vst [vmem:[%s1196 + $0xe0] sm:$0xff] %v1158
          %1226 = vst [vmem:[%s1196 + $0xe8] sm:$0xff] %v1159
          %1227 = vst [vmem:[%s1196 + $0xf0] sm:$0xff] %v1160
          %1228 = vst [vmem:[%s1196 + $0xf8] sm:$0xff] %v1161
          %1229 = vst [vmem:[%s1196 + $0x100] sm:$0xff] %v1162
          %1230 = vst [vmem:[%s1196 + $0x108] sm:$0xff] %v1163
          %1231 = vst [vmem:[%s1196 + $0x110] sm:$0xff] %v1164
          %1232 = vst [vmem:[%s1196 + $0x118] sm:$0xff] %v1165
          %1233 = vst [vmem:[%s1196 + $0x120] sm:$0xff] %v1166
          %1234 = vst [vmem:[%s1196 + $0x128] sm:$0xff] %v1167
          %1235 = vst [vmem:[%s1196 + $0x130] sm:$0xff] %v1168
          %1236 = vst [vmem:[%s1196 + $0x138] sm:$0xff] %v1169
          %1237 = vst [vmem:[%s1196 + $0x140] sm:$0xff] %v1170
          %1238 = vst [vmem:[%s1196 + $0x148] sm:$0xff] %v1171
          %1239 = vst [vmem:[%s1196 + $0x150] sm:$0xff] %v1172
          %1240 = vst [vmem:[%s1196 + $0x158] sm:$0xff] %v1173
          %1241 = vst [vmem:[%s1196 + $0x160] sm:$0xff] %v1174
          %1242 = vst [vmem:[%s1196 + $0x168] sm:$0xff] %v1175
          %1243 = vst [vmem:[%s1196 + $0x170] sm:$0xff] %v1176
          %1244 = vst [vmem:[%s1196 + $0x178] sm:$0xff] %v1177
          %1245 = vst [vmem:[%s1196 + $0x180] sm:$0xff] %v1178
          %1246 = vst [vmem:[%s1196 + $0x188] sm:$0xff] %v1179
          %1247 = vst [vmem:[%s1196 + $0x190] sm:$0xff] %v1180
          %1248 = vst [vmem:[%s1196 + $0x198] sm:$0xff] %v1181
          %1249 = vst [vmem:[%s1196 + $0x1a0] sm:$0xff] %v1182
          %1250 = vst [vmem:[%s1196 + $0x1a8] sm:$0xff] %v1183
          %1251 = vst [vmem:[%s1196 + $0x1b0] sm:$0xff] %v1184
          %1252 = vst [vmem:[%s1196 + $0x1b8] sm:$0xff] %v1185
          %1253 = vst [vmem:[%s1196 + $0x1c0] sm:$0xff] %v1186
          %1254 = vst [vmem:[%s1196 + $0x1c8] sm:$0xff] %v1187
          %1255 = vst [vmem:[%s1196 + $0x1d0] sm:$0xff] %v1188
          %1256 = vst [vmem:[%s1196 + $0x1d8] sm:$0xff] %v1189
          %1257 = vst [vmem:[%s1196 + $0x1e0] sm:$0xff] %v1190
          %1258 = vst [vmem:[%s1196 + $0x1e8] sm:$0xff] %v1191
          %1259 = vst [vmem:[%s1196 + $0x1f0] sm:$0xff] %v1192
          %1260 = vst [vmem:[%s1196 + $0x1f8] sm:$0xff] %v1193
        $region36: #{tpu_custom_call.1} parent=27 // pred_fallthru
          _
        %v1261 = vld [vmem:[%s186] sm:$0xff]
        %v1262 = vld [vmem:[%s186 + $0x8] sm:$0xff]
        %v1263 = vld [vmem:[%s186 + $0x10] sm:$0xff]
        %v1264 = vld [vmem:[%s186 + $0x18] sm:$0xff]
        %s1265 = smul.u32 %s25, 256
        %s1266 = sshra.s32 %s1265, 7
        %s1267 = sand.u32 %s1265, 127
        %s1268 = smul.addr %s1266, 8
        %s1269 = scalar_lea.vmem %s186, %s1268 [#allocation3]
        %v1270 = vld [vmem:[%s1269] sm:$0xff]
        %v1271 = vld [vmem:[%s1269 + $0x8] sm:$0xff]
        %v1272 = vld [vmem:[%s1269 + $0x10] sm:$0xff]
        %v1273 = vld [vmem:[%s1269 + $0x18] sm:$0xff]
        %v1274 = vld [vmem:[#allocation2] sm:$0xff]
        %v1275 = vld [vmem:[#allocation2 + $0x8] sm:$0xff]
        %v1276 = vld [vmem:[#allocation2 + $0x10] sm:$0xff]
        %v1277 = vld [vmem:[#allocation2 + $0x18] sm:$0xff]
        %v1278 = vld [vmem:[#allocation2 + $0x20] sm:$0xff]
        %v1279 = vld [vmem:[#allocation2 + $0x28] sm:$0xff]
        %v1280 = vld [vmem:[#allocation2 + $0x30] sm:$0xff]
        %v1281 = vld [vmem:[#allocation2 + $0x38] sm:$0xff]
        %v1282 = vld [vmem:[#allocation2 + $0x40] sm:$0xff]
        %v1283 = vld [vmem:[#allocation2 + $0x48] sm:$0xff]
        %v1284 = vld [vmem:[#allocation2 + $0x50] sm:$0xff]
        %v1285 = vld [vmem:[#allocation2 + $0x58] sm:$0xff]
        %v1286 = vld [vmem:[#allocation2 + $0x60] sm:$0xff]
        %v1287 = vld [vmem:[#allocation2 + $0x68] sm:$0xff]
        %v1288 = vld [vmem:[#allocation2 + $0x70] sm:$0xff]
        %v1289 = vld [vmem:[#allocation2 + $0x78] sm:$0xff]
        %v1290 = vld [vmem:[#allocation2 + $0x80] sm:$0xff]
        %v1291 = vld [vmem:[#allocation2 + $0x88] sm:$0xff]
        %v1292 = vld [vmem:[#allocation2 + $0x90] sm:$0xff]
        %v1293 = vld [vmem:[#allocation2 + $0x98] sm:$0xff]
        %v1294 = vld [vmem:[#allocation2 + $0xa0] sm:$0xff]
        %v1295 = vld [vmem:[#allocation2 + $0xa8] sm:$0xff]
        %v1296 = vld [vmem:[#allocation2 + $0xb0] sm:$0xff]
        %v1297 = vld [vmem:[#allocation2 + $0xb8] sm:$0xff]
        %v1298 = vld [vmem:[#allocation2 + $0xc0] sm:$0xff]
        %v1299 = vld [vmem:[#allocation2 + $0xc8] sm:$0xff]
        %v1300 = vld [vmem:[#allocation2 + $0xd0] sm:$0xff]
        %v1301 = vld [vmem:[#allocation2 + $0xd8] sm:$0xff]
        %v1302 = vld [vmem:[#allocation2 + $0xe0] sm:$0xff]
        %v1303 = vld [vmem:[#allocation2 + $0xe8] sm:$0xff]
        %v1304 = vld [vmem:[#allocation2 + $0xf0] sm:$0xff]
        %v1305 = vld [vmem:[#allocation2 + $0xf8] sm:$0xff]
        %v1306 = vld [vmem:[#allocation2 + $0x100] sm:$0xff]
        %v1307 = vld [vmem:[#allocation2 + $0x108] sm:$0xff]
        %v1308 = vld [vmem:[#allocation2 + $0x110] sm:$0xff]
        %v1309 = vld [vmem:[#allocation2 + $0x118] sm:$0xff]
        %v1310 = vld [vmem:[#allocation2 + $0x120] sm:$0xff]
        %v1311 = vld [vmem:[#allocation2 + $0x128] sm:$0xff]
        %v1312 = vld [vmem:[#allocation2 + $0x130] sm:$0xff]
        %v1313 = vld [vmem:[#allocation2 + $0x138] sm:$0xff]
        %v1314 = vld [vmem:[#allocation2 + $0x140] sm:$0xff]
        %v1315 = vld [vmem:[#allocation2 + $0x148] sm:$0xff]
        %v1316 = vld [vmem:[#allocation2 + $0x150] sm:$0xff]
        %v1317 = vld [vmem:[#allocation2 + $0x158] sm:$0xff]
        %v1318 = vld [vmem:[#allocation2 + $0x160] sm:$0xff]
        %v1319 = vld [vmem:[#allocation2 + $0x168] sm:$0xff]
        %v1320 = vld [vmem:[#allocation2 + $0x170] sm:$0xff]
        %v1321 = vld [vmem:[#allocation2 + $0x178] sm:$0xff]
        %v1322 = vld [vmem:[#allocation2 + $0x180] sm:$0xff]
        %v1323 = vld [vmem:[#allocation2 + $0x188] sm:$0xff]
        %v1324 = vld [vmem:[#allocation2 + $0x190] sm:$0xff]
        %v1325 = vld [vmem:[#allocation2 + $0x198] sm:$0xff]
        %v1326 = vld [vmem:[#allocation2 + $0x1a0] sm:$0xff]
        %v1327 = vld [vmem:[#allocation2 + $0x1a8] sm:$0xff]
        %v1328 = vld [vmem:[#allocation2 + $0x1b0] sm:$0xff]
        %v1329 = vld [vmem:[#allocation2 + $0x1b8] sm:$0xff]
        %v1330 = vld [vmem:[#allocation2 + $0x1c0] sm:$0xff]
        %v1331 = vld [vmem:[#allocation2 + $0x1c8] sm:$0xff]
        %v1332 = vld [vmem:[#allocation2 + $0x1d0] sm:$0xff]
        %v1333 = vld [vmem:[#allocation2 + $0x1d8] sm:$0xff]
        %v1334 = vld [vmem:[#allocation2 + $0x1e0] sm:$0xff]
        %v1335 = vld [vmem:[#allocation2 + $0x1e8] sm:$0xff]
        %v1336 = vld [vmem:[#allocation2 + $0x1f0] sm:$0xff]
        %v1337 = vld [vmem:[#allocation2 + $0x1f8] sm:$0xff]
        %1338 = vmatprep.subr.mxu0 %v1305
        %1339 = vmatpush1.msra.mxu0 %v1304
        %1340 = vmatprep.subr.mxu0 %v1303
        %1341 = vmatpush1.msra.mxu0 %v1302
        %1342 = vmatprep.subr.mxu0 %v1301
        %1343 = vmatpush1.msra.mxu0 %v1300
        %1344 = vmatprep.subr.mxu0 %v1299
        %1345 = vmatpush1.msra.mxu0 %v1298
        %1346 = vmatprep.subr.mxu0 %v1297
        %1347 = vmatpush1.msra.mxu0 %v1296
        %1348 = vmatprep.subr.mxu0 %v1295
        %1349 = vmatpush1.msra.mxu0 %v1294
        %1350 = vmatprep.subr.mxu0 %v1293
        %1351 = vmatpush1.msra.mxu0 %v1292
        %1352 = vmatprep.subr.mxu0 %v1291
        %1353 = vmatpush1.msra.mxu0 %v1290
        %1354 = vmatprep.subr.mxu0 %v1289
        %1355 = vmatpush1.msra.mxu0 %v1288
        %1356 = vmatprep.subr.mxu0 %v1287
        %1357 = vmatpush1.msra.mxu0 %v1286
        %1358 = vmatprep.subr.mxu0 %v1285
        %1359 = vmatpush1.msra.mxu0 %v1284
        %1360 = vmatprep.subr.mxu0 %v1283
        %1361 = vmatpush1.msra.mxu0 %v1282
        %1362 = vmatprep.subr.mxu0 %v1281
        %1363 = vmatpush1.msra.mxu0 %v1280
        %1364 = vmatprep.subr.mxu0 %v1279
        %1365 = vmatpush1.msra.mxu0 %v1278
        %1366 = vmatprep.subr.mxu0 %v1277
        %1367 = vmatpush1.msra.mxu0 %v1276
        %1368 = vmatprep.subr.mxu0 %v1275
        %1369 = vmatpush1.msra.mxu0 %v1274
        %1370 = vmatprep.subr.mxu0 %v1337
        %1371 = vmatpush2.msra.mxu0 %v1336
        %1372 = vmatprep.subr.mxu0 %v1335
        %1373 = vmatpush2.msra.mxu0 %v1334
        %1374 = vmatprep.subr.mxu0 %v1333
        %1375 = vmatpush2.msra.mxu0 %v1332
        %1376 = vmatprep.subr.mxu0 %v1331
        %1377 = vmatpush2.msra.mxu0 %v1330
        %1378 = vmatprep.subr.mxu0 %v1329
        %1379 = vmatpush2.msra.mxu0 %v1328
        %1380 = vmatprep.subr.mxu0 %v1327
        %1381 = vmatpush2.msra.mxu0 %v1326
        %1382 = vmatprep.subr.mxu0 %v1325
        %1383 = vmatpush2.msra.mxu0 %v1324
        %1384 = vmatprep.subr.mxu0 %v1323
        %1385 = vmatpush2.msra.mxu0 %v1322
        %1386 = vmatprep.subr.mxu0 %v1321
        %1387 = vmatpush2.msra.mxu0 %v1320
        %1388 = vmatprep.subr.mxu0 %v1319
        %1389 = vmatpush2.msra.mxu0 %v1318
        %1390 = vmatprep.subr.mxu0 %v1317
        %1391 = vmatpush2.msra.mxu0 %v1316
        %1392 = vmatprep.subr.mxu0 %v1315
        %1393 = vmatpush2.msra.mxu0 %v1314
        %1394 = vmatprep.subr.mxu0 %v1313
        %1395 = vmatpush2.msra.mxu0 %v1312
        %1396 = vmatprep.subr.mxu0 %v1311
        %1397 = vmatpush2.msra.mxu0 %v1310
        %1398 = vmatprep.subr.mxu0 %v1309
        %1399 = vmatpush2.msra.mxu0 %v1308
        %1400 = vmatprep.subr.mxu0 %v1307
        %1401 = vmatpush2.msra.mxu0 %v1306
        %1402 = vmatprep.mubr.f32.mxu0 %v1262
        %1403 = vmatmul.mubr.f32.gmra.mxu0 %v1261
        %v1404 = vpop.f32.mrf.mxu0
        %v1405 = vadd.f32 0.0, %v1404
        %v1406 = vpop.f32.mrf.mxu0
        %v1407 = vadd.f32 0.0, %v1406
        %1408 = vmatprep.mubr.f32.mxu0 %v1264
        %1409 = vmatmul.mubr.f32.gmra.mxu0 %v1263
        %v1410 = vpop.f32.mrf.mxu0
        %v1411 = vadd.f32 0.0, %v1410
        %v1412 = vpop.f32.mrf.mxu0
        %v1413 = vadd.f32 0.0, %v1412
        %1414 = vdwg.mxu0
        %v1415 = vadd.f32 %v1270, %v1405
        %v1416 = vadd.f32 %v1271, %v1407
        %v1417 = vadd.f32 %v1272, %v1411
        %v1418 = vadd.f32 %v1273, %v1413
        %1419 = vst [vmem:[%s215] sm:$0xff] %v1415
        %1420 = vst [vmem:[%s215 + $0x8] sm:$0xff] %v1416
        %1421 = vst [vmem:[%s215 + $0x10] sm:$0xff] %v1417
        %1422 = vst [vmem:[%s215 + $0x18] sm:$0xff] %v1418
        %s1423 = sand.u32 %s106, 1
        %s1424 = scalar_lea.sflag [#allocation5], %s1423
        %s1425 = sand.u32 %s106, 1
        %s1426 = smul.addr %s1425, 32
        %s1427 = scalar_lea.vmem [#allocation6], %s1426
        // Predicated region
        $region37: #{tpu_custom_call.1} parent=27 // pred_check
          %p1428 = pneg %p116
        $region38: #{tpu_custom_call.1} parent=27 // pred_check_branch
          %1430 = sbr.rel (%p1428) target = $region40
        $region39: #{tpu_custom_call.1} parent=27 // pred_region
          %s1431 = smul.u32 2, %s26
          %s1432 = smul.u32 2, %s25
          %s1434 = ssub.s32 512, 512
          %1435 = vsyncadd %s1424, %s1434
          %s1436 = smul.addr %s1431, 2
          %s1437 = sadd.s32 %s1432, %s1436
          %s1438 = smul.addr %s24, 4
          %s1439 = sadd.s32 %s1437, %s1438
          %s1440 = smul.addr %s1439, 128
          %s1441 = scalar_lea.hbm %s2, %s1440
          %s1442 = sshll.u32 %s1427, 4
          %s1443 = int_to_ptr.vmem [resolvable:$true] %s1442
          %1448 = dma.vmem_to_hbm [thread:$0]  %s1443, 512, %s1441, %s1424, 256, 256, 16
        $region40: #{tpu_custom_call.1} parent=27 // pred_fallthru
          _
      $region28: #{tpu_custom_call.1} parent=5 // pred_fallthru
        _
      %p1449 = scmp.le.s32.totalorder 2, %s14
      // Predicated region
      $region41: #{tpu_custom_call.1} parent=5 // pred_check
        %p1450 = pneg %p1449
      $region42: #{tpu_custom_call.1} parent=5 // pred_check_branch
        %1452 = sbr.rel (%p1450) target = $region44
      $region43: #{tpu_custom_call.1} parent=5 // pred_region
        %s1453 = ssub.s32 %s14, 2
        // Predicated region
        $region45: #{tpu_custom_call.1} parent=43 // pred_check
          %p1454 = pneg %p122
        $region46: #{tpu_custom_call.1} parent=43 // pred_check_branch
          %1456 = sbr.rel (%p1454) target = $region48
        $region47: #{tpu_custom_call.1} parent=43 // pred_region
          %s1457 = sand.u32 %s107, 1
          %s1458 = scalar_lea.sflag [#allocation5], %s1457
          %s1459 = sand.u32 %s107, 1
          %s1460 = smul.addr %s1459, 32
          %s1461 = scalar_lea.vmem [#allocation6], %s1460
          %1462 = dma.done %s1458, 512
        $region48: #{tpu_custom_call.1} parent=43 // pred_fallthru
          _
      $region44: #{tpu_custom_call.1} parent=5 // pred_fallthru
        _
    $region6: #{tpu_custom_call.1} parent=1 // loop_footer
      %s18 = sadd.s32 1, %s14
    $region7: #{tpu_custom_call.1} parent=1 // loop_footer_branch
      %13 = sbr.rel target = $region3
    $region8: #{tpu_custom_call.1} parent=1 // loop_exit
      _
    %1463 = vsyncpa [#allocation4], 1
    %s1464 = scalar_lea.sflag [#allocation4], 1
    %1465 = vsyncpa %s1464, 1
    %1466 = vsyncpa [#allocation5], 1
    %s1467 = scalar_lea.sflag [#allocation5], 1
    %1468 = vsyncpa %s1467, 1

</llo_original>
